<compile_context>
chip_gen: v7x
topology: tpu7x:2x2x1
jax: 0.10.0
libtpu: 0.0.40
codegen_flags: <defaults>
</compile_context>

<pallas_src>
import functools

import jax
import jax.numpy as jnp
from jax import lax
from jax.experimental import pallas as pl
from jax.experimental.pallas import tpu as pltpu

EPS = 1e-5


def _layernorm_kernel(x_ref, w_ref, b_ref, o_ref):
    # x_ref: (TR, C) tile of rows; w_ref / b_ref: (1, C) affine params
    # (constant index_map -> resident across all grid steps).
    x = x_ref[...].astype(jnp.float32)
    w = w_ref[...].astype(jnp.float32)
    b = b_ref[...].astype(jnp.float32)

    inv_c = 1.0 / x.shape[-1]
    # Centered two-pass variance (matches torch.nn.LayerNorm numerics; the
    # extra reduce is free — this kernel is HBM-bound).
    mean = jnp.sum(x, axis=-1, keepdims=True) * inv_c
    xc = x - mean
    var = jnp.sum(xc * xc, axis=-1, keepdims=True) * inv_c
    inv = lax.rsqrt(var + EPS)

    o_ref[...] = (xc * inv * w + b).astype(o_ref.dtype)


def _pick_block_rows(n_rows, c, itemsize):
    """Pick the row-tile size.

    Prefers the largest sublane-aligned tile that exactly divides n_rows while
    keeping >= 4 grid steps (2 per TensorCore on v7x megacore; 2 per TC keeps
    per-TC double-buffering), falling back to >= 2 and then 1 step.  If no
    aligned divisor exists, returns an aligned tile and lets Pallas's masked
    partial-block writeback handle the ragged tail.

    Alignment granularity is the packed sublane size of the dtype
    (8 rows f32, 16 bf16, 32 int8/fp8).  VMEM budget: in+out, double-buffered
    <= ~16 MiB, comfortably inside every generation's scoped-VMEM limit given
    vmem_limit_bytes=32 MiB.
    """
    pack = 8 * max(1, 4 // itemsize)          # 8 (f32), 16 (bf16), 32 (i8/fp8)
    vmem_budget = 16 * 1024 * 1024            # in + out, double-buffered
    max_rows = vmem_budget // (c * itemsize * 4)
    max_rows = max(pack, (max_rows // pack) * pack)
    if n_rows >= pack:
        max_rows = min(max_rows, (n_rows // pack) * pack)

    for min_steps in (4, 2, 1):
        best = 0
        br = pack
        while br <= max_rows:
            if n_rows % br == 0 and n_rows // br >= min_steps:
                best = br
            br += pack
        if best:
            return best

    # No aligned divisor (n_rows not a multiple of pack): aligned tile + masked
    # partial last block (no host-side pad/slice needed).
    return max(pack, (min(max_rows, 512) // pack) * pack)


@functools.partial(jax.jit, static_argnames=("block_rows",))
def layernorm_pallas(x, weight, bias, *, block_rows=None):
    """LayerNorm over the last axis of x (any leading shape), elementwise affine."""
    orig_shape = x.shape
    C = orig_shape[-1]
    x2 = x.reshape(-1, C)
    N = x2.shape[0]
    itemsize = x.dtype.itemsize

    if block_rows is None:
        block_rows = _pick_block_rows(N, C, itemsize)

    w2 = weight.reshape(1, C)
    b2 = bias.reshape(1, C)

    grid = (pl.cdiv(N, block_rows),)

    cost = pl.CostEstimate(
        flops=9 * N * C,                      # 2 reduces + center/scale/affine
        transcendentals=N,                    # one rsqrt per row
        bytes_accessed=2 * N * C * itemsize + 2 * C * weight.dtype.itemsize,
    )

    out = pl.pallas_call(
        _layernorm_kernel,
        out_shape=jax.ShapeDtypeStruct((N, C), x.dtype),
        grid_spec=pltpu.PrefetchScalarGridSpec(
            num_scalar_prefetch=0,
            grid=grid,
            in_specs=[
                pl.BlockSpec((block_rows, C), lambda i: (i, 0)),
                pl.BlockSpec((1, C), lambda i: (0, 0)),
                pl.BlockSpec((1, C), lambda i: (0, 0)),
            ],
            out_specs=pl.BlockSpec((block_rows, C), lambda i: (i, 0)),
        ),
        compiler_params=pltpu.CompilerParams(
            dimension_semantics=("parallel",),
            vmem_limit_bytes=32 * 1024 * 1024,
        ),
        cost_estimate=cost,
    )(x2, w2, b2)

    return out.reshape(orig_shape)


def layernorm_ref(x, weight, bias):
    xf = x.astype(jnp.float32)
    mean = jnp.mean(xf, axis=-1, keepdims=True)
    var = jnp.mean((xf - mean) ** 2, axis=-1, keepdims=True)
    return ((xf - mean) * lax.rsqrt(var + EPS) * weight + bias).astype(x.dtype)


if __name__ == "__main__":
    key = jax.random.PRNGKey(0)
    kx, kw, kb = jax.random.split(key, 3)

    # Same layout as the module ([B, H, W, C] with C=128).
    x = jax.random.normal(kx, (1, 56, 56, 128), dtype=jnp.float32)

    # Deterministic, non-trivial affine params (PyTorch default would be ones/zeros).
    weight = 1.0 + 0.1 * jax.random.normal(kw, (128,), dtype=jnp.float32)
    bias = 0.1 * jax.random.normal(kb, (128,), dtype=jnp.float32)

    out = layernorm_pallas(x, weight, bias)
    out = jax.block_until_ready(out)

    ref = layernorm_ref(x, weight, bias)
    assert out.shape == x.shape
    assert jnp.allclose(out, ref, atol=1e-5, rtol=1e-5), "mismatch vs reference"

    print("KERNEL_OK")
</pallas_src>

<mosaic_0001>
module attributes {stable_mosaic.version = 11 : i64} {
  func.func @_layernorm_kernel(%arg0: i32, %arg1: memref<784x128xf32, #tpu.memory_space<vmem>>, %arg2: memref<1x128xf32, #tpu.memory_space<vmem>>, %arg3: memref<1x128xf32, #tpu.memory_space<vmem>>, %arg4: memref<784x128xf32, #tpu.memory_space<vmem>>) attributes {dimension_semantics = [#tpu.dimension_semantics<parallel>], iteration_bounds = array<i64: 4>, scalar_prefetch = 0 : i64, scratch_operands = 0 : i64, tpu.core_type = #tpu.core_type<tc>, window_params = [{transform_indices = @transform_0, window_bounds = array<i64: 784, 128>}, {pipeline_mode = #tpu.pipeline_mode<synchronous>, transform_indices = @transform_1, window_bounds = array<i64: 1, 128>}, {pipeline_mode = #tpu.pipeline_mode<synchronous>, transform_indices = @transform_2, window_bounds = array<i64: 1, 128>}, {transform_indices = @transform_3, window_bounds = array<i64: 784, 128>}]} {
    %c0 = arith.constant 0 : index
    %c0_0 = arith.constant 0 : index
    %0 = vector.load %arg1[%c0, %c0_0] : memref<784x128xf32, #tpu.memory_space<vmem>>, vector<784x128xf32>
    %c0_1 = arith.constant 0 : index
    %c0_2 = arith.constant 0 : index
    %1 = vector.load %arg2[%c0_1, %c0_2] : memref<1x128xf32, #tpu.memory_space<vmem>>, vector<1x128xf32>
    %c0_3 = arith.constant 0 : index
    %c0_4 = arith.constant 0 : index
    %2 = vector.load %arg3[%c0_3, %c0_4] : memref<1x128xf32, #tpu.memory_space<vmem>>, vector<1x128xf32>
    %cst = arith.constant dense<0.000000e+00> : vector<784xf32>
    %3 = vector.multi_reduction <add>, %0, %cst [1] : vector<784x128xf32> to vector<784xf32>
    %4 = vector.shape_cast %3 : vector<784xf32> to vector<784x1xf32>
    %cst_5 = arith.constant 7.812500e-03 : f32
    %5 = vector.broadcast %cst_5 : f32 to vector<784x1xf32>
    %6 = arith.mulf %4, %5 : vector<784x1xf32>
    %7 = vector.broadcast %6 : vector<784x1xf32> to vector<784x128xf32>
    %8 = arith.subf %0, %7 : vector<784x128xf32>
    %9 = arith.mulf %8, %8 : vector<784x128xf32>
    %cst_6 = arith.constant dense<0.000000e+00> : vector<784xf32>
    %10 = vector.multi_reduction <add>, %9, %cst_6 [1] : vector<784x128xf32> to vector<784xf32>
    %11 = vector.shape_cast %10 : vector<784xf32> to vector<784x1xf32>
    %cst_7 = arith.constant 7.812500e-03 : f32
    %12 = vector.broadcast %cst_7 : f32 to vector<784x1xf32>
    %13 = arith.mulf %11, %12 : vector<784x1xf32>
    %cst_8 = arith.constant 9.99999974E-6 : f32
    %14 = vector.broadcast %cst_8 : f32 to vector<784x1xf32>
    %15 = arith.addf %13, %14 : vector<784x1xf32>
    %16 = math.rsqrt %15 : vector<784x1xf32>
    %17 = vector.broadcast %16 : vector<784x1xf32> to vector<784x128xf32>
    %18 = arith.mulf %8, %17 : vector<784x128xf32>
    %19 = vector.broadcast %1 : vector<1x128xf32> to vector<784x128xf32>
    %20 = arith.mulf %18, %19 : vector<784x128xf32>
    %21 = vector.broadcast %2 : vector<1x128xf32> to vector<784x128xf32>
    %22 = arith.addf %20, %21 : vector<784x128xf32>
    %c0_9 = arith.constant 0 : index
    %c0_10 = arith.constant 0 : index
    %23 = vector.load %arg4[%c0_9, %c0_10] : memref<784x128xf32, #tpu.memory_space<vmem>>, vector<784x128xf32>
    tpu.vector_store %arg4[%c0_9, %c0_10], %22 {strides = array<i32>} : memref<784x128xf32, #tpu.memory_space<vmem>>, vector<784x128xf32>,
    return
  }
  func.func @transform_0(%arg0: i32) -> (i32, i32) {
    %c0_i32 = arith.constant 0 : i32
    %c0_i32_0 = arith.constant 0 : i32
    return %arg0, %c0_i32 : i32, i32
  }
  func.func @transform_1(%arg0: i32) -> (i32, i32) {
    %c0_i32 = arith.constant 0 : i32
    %c0_i32_0 = arith.constant 0 : i32
    %c0_i32_1 = arith.constant 0 : i32
    return %c0_i32, %c0_i32_0 : i32, i32
  }
  func.func @transform_2(%arg0: i32) -> (i32, i32) {
    %c0_i32 = arith.constant 0 : i32
    %c0_i32_0 = arith.constant 0 : i32
    %c0_i32_1 = arith.constant 0 : i32
    return %c0_i32, %c0_i32_0 : i32, i32
  }
  func.func @transform_3(%arg0: i32) -> (i32, i32) {
    %c0_i32 = arith.constant 0 : i32
    %c0_i32_0 = arith.constant 0 : i32
    return %arg0, %c0_i32 : i32, i32
  }
}

</mosaic_0001>

<llo_original>
// kernel: layernorm_pallas.1
$region0: #{layernorm_pallas.1}
  #allocation0 [shape = 'u32[]', space=smem, size = 0x4, offset = 0x4, fixed_abs, tag = 'smem constant byte address 0x4 - core index']
  #allocation1 [shape = 'u32[144,128]{1,0:T(1,128)}', space=vmem, size = 0x12000, scoped, tag = 'internal scratch']
  %s0 = inlined_call_operand.hbm [shape: f32[3136,128], index: 0, kind: input, shape index: {}]
  %s1 = inlined_call_operand.hbm [shape: f32[1,128], index: 1, kind: input, shape index: {}]
  %s2 = inlined_call_operand.hbm [shape: f32[1,128], index: 2, kind: input, shape index: {}]
  %s3 = inlined_call_operand.hbm [shape: f32[3136,128], index: 3, kind: output, shape index: {}]
  %s4 = sld [smem:[#allocation0]]
  $region57: #{layernorm_pallas.1} parent=0
    _
  %s6 = ssub.s32 1, %s4
  %s7 = scalar_select 0, %s6, %s4
  $region1: #{layernorm_pallas.1} parent=0
    #allocation2 [shape = 'u8[802816]{0}', space=vmem, size = 0xc4000, scoped, tag = 'input window, operand 0']
    #allocation3 [shape = 's32[2]{0}', space=sflag, size = 0x8, scoped, tag = 'scoped memory for layernorm_pallas.1']
    #allocation4 [shape = 's32[2]{0}', space=sflag, size = 0x8, scoped, tag = 'scoped memory for layernorm_pallas.1']
    #allocation5 [shape = 'u8[512]{0}', space=vmem, size = 0x400, scoped, tag = 'input window, operand 1, single buffered']
    #allocation6 [shape = 's32[1]{0}', space=sflag, size = 0x4, scoped, tag = 'scoped memory for layernorm_pallas.1']
    #allocation7 [shape = 'u8[512]{0}', space=vmem, size = 0x400, scoped, tag = 'input window, operand 2, single buffered']
    #allocation8 [shape = 'u8[802816]{0}', space=vmem, size = 0xc4000, scoped, tag = 'output window, operand 0']
    %8 = vsyncpa [#allocation3], 0
    %s9 = scalar_lea.sflag [#allocation3], 1
    %10 = vsyncpa %s9, 0
    %11 = vsyncpa [#allocation6], 0
    %12 = vsyncpa [#allocation4], 0
    %s13 = scalar_lea.sflag [#allocation4], 1
    %14 = vsyncpa %s13, 0
    loop: start=0, step=1, limit=6
    $region2: #{layernorm_pallas.1} parent=1 // loop_pre_header
      _
    $region3: #{layernorm_pallas.1} parent=1 // loop_header
      %s16 = sphi 0, %s20
      %p17 = scmp.ge.s32.totalorder %s16, 6
      %s26 = sphi 0, %s28
      %s29 = sphi 0, %s26
      %s30 = sphi 0, %s29
      %s46 = sphi 0, %s30
      %s50 = sphi 0, %s50
      %s52 = sphi 0, %s50
      %s53 = sphi 0, %s52
      %s67 = sphi 0, %s53
      %s71 = sphi 0, %s71
      %s73 = sphi 0, %s71
      %s74 = sphi 0, %s73
      %s88 = sphi 0, %s74
      %s94 = sphi 0, %s96
      %s97 = sphi 0, %s94
      %s98 = sphi 0, %s97
      %s114 = sphi 0, %s98
    $region4: #{layernorm_pallas.1} parent=1 // loop_header_branch
      %19 = sbr.rel (%p17) target = $region8
    $region5: #{layernorm_pallas.1} parent=1 // loop_body
      %s21 = ssub.s32 %s16, 1
      %s22 = ssub.s32 %s16, 2
      %s23 = sadd.s32 %s16, 1
      %s24 = ssub.s32 %s16, %s23
      %p25 = scmp.eq.s32.totalorder %s24, 0
      %s27 = sadd.s32 %s26, 1
      %s28 = scalar_select %p25, %s26, %s27
      %p31 = pneg %p25
      %p32 = scmp.eq.s32.totalorder %s16, 3
      %p33 = por %p31, %p32
      %p34 = scmp.ne.s32.totalorder %s26, %s29
      %p35 = scmp.eq.s32.totalorder %s16, 0
      %p36 = por %p34, %p35
      %p37 = scmp.ne.s32.totalorder %s26, %s29
      %p38 = scmp.eq.s32.totalorder %s21, 3
      %p39 = por %p37, %p38
      %p40 = scmp.ne.s32.totalorder %s29, %s30
      %p41 = scmp.eq.s32.totalorder %s21, 0
      %p42 = por %p40, %p41
      %p43 = scmp.ne.s32.totalorder %s29, %s30
      %p44 = scmp.eq.s32.totalorder %s22, 3
      %p45 = por %p43, %p44
      %p47 = scmp.ne.s32.totalorder %s30, %s46
      %p48 = scmp.eq.s32.totalorder %s22, 0
      %p49 = por %p47, %p48
      %s51 = sadd.s32 %s50, 1
      %p54 = scmp.eq.s32.totalorder %s16, 3
      %p55 = scmp.ne.s32.totalorder %s50, %s52
      %p56 = scmp.eq.s32.totalorder %s16, 0
      %p57 = por %p55, %p56
      %p58 = scmp.ne.s32.totalorder %s50, %s52
      %p59 = scmp.eq.s32.totalorder %s21, 3
      %p60 = por %p58, %p59
      %p61 = scmp.ne.s32.totalorder %s52, %s53
      %p62 = scmp.eq.s32.totalorder %s21, 0
      %p63 = por %p61, %p62
      %p64 = scmp.ne.s32.totalorder %s52, %s53
      %p65 = scmp.eq.s32.totalorder %s22, 3
      %p66 = por %p64, %p65
      %p68 = scmp.ne.s32.totalorder %s53, %s67
      %p69 = scmp.eq.s32.totalorder %s22, 0
      %p70 = por %p68, %p69
      %s72 = sadd.s32 %s71, 1
      %p75 = scmp.eq.s32.totalorder %s16, 3
      %p76 = scmp.ne.s32.totalorder %s71, %s73
      %p77 = scmp.eq.s32.totalorder %s16, 0
      %p78 = por %p76, %p77
      %p79 = scmp.ne.s32.totalorder %s71, %s73
      %p80 = scmp.eq.s32.totalorder %s21, 3
      %p81 = por %p79, %p80
      %p82 = scmp.ne.s32.totalorder %s73, %s74
      %p83 = scmp.eq.s32.totalorder %s21, 0
      %p84 = por %p82, %p83
      %p85 = scmp.ne.s32.totalorder %s73, %s74
      %p86 = scmp.eq.s32.totalorder %s22, 3
      %p87 = por %p85, %p86
      %p89 = scmp.ne.s32.totalorder %s74, %s88
      %p90 = scmp.eq.s32.totalorder %s22, 0
      %p91 = por %p89, %p90
      %s92 = ssub.s32 %s16, %s23
      %p93 = scmp.eq.s32.totalorder %s92, 0
      %s95 = sadd.s32 %s94, 1
      %s96 = scalar_select %p93, %s94, %s95
      %p99 = pneg %p93
      %p100 = scmp.eq.s32.totalorder %s16, 3
      %p101 = por %p99, %p100
      %p102 = scmp.ne.s32.totalorder %s94, %s97
      %p103 = scmp.eq.s32.totalorder %s16, 0
      %p104 = por %p102, %p103
      %p105 = scmp.ne.s32.totalorder %s94, %s97
      %p106 = scmp.eq.s32.totalorder %s21, 3
      %p107 = por %p105, %p106
      %p108 = scmp.ne.s32.totalorder %s97, %s98
      %p109 = scmp.eq.s32.totalorder %s21, 0
      %p110 = por %p108, %p109
      %p111 = scmp.ne.s32.totalorder %s97, %s98
      %p112 = scmp.eq.s32.totalorder %s22, 3
      %p113 = por %p111, %p112
      %p115 = scmp.ne.s32.totalorder %s98, %s114
      %p116 = scmp.eq.s32.totalorder %s22, 0
      %p117 = por %p115, %p116
      %p118 = scmp.le.s32.totalorder 1, %s16
      %p119 = scmp.lt.s32.totalorder %s16, 5
      %p120 = pnand %p118, %p119
      %p121 = pneg %p120
      // Predicated region
      $region9: #{layernorm_pallas.1} parent=5 // pred_check
        _
      $region10: #{layernorm_pallas.1} parent=5 // pred_check_branch
        %123 = sbr.rel (%p120) target = $region12
      $region11: #{layernorm_pallas.1} parent=5 // pred_region
        %s124 = ssub.s32 %s16, 1
        // Predicated region
        $region13: #{layernorm_pallas.1} parent=11 // pred_check
          %p125 = pneg %p63
        $region14: #{layernorm_pallas.1} parent=11 // pred_check_branch
          %127 = sbr.rel (%p125) target = $region16
        $region15: #{layernorm_pallas.1} parent=11 // pred_region
          %s129 = ssub.s32 16, 16
          %130 = vsyncadd [#allocation6], %s129
          %s132 = sshll.u32 [#allocation5], 4
          %s133 = int_to_ptr.vmem [resolvable:$true] %s132
          %135 = dma.hbm_to_vmem [thread:$0]  %s1, 16, %s133, [#allocation6]
        $region16: #{layernorm_pallas.1} parent=11 // pred_fallthru
          _
        // Predicated region
        $region17: #{layernorm_pallas.1} parent=11 // pred_check
          %p136 = pneg %p84
        $region18: #{layernorm_pallas.1} parent=11 // pred_check_branch
          %138 = sbr.rel (%p136) target = $region20
        $region19: #{layernorm_pallas.1} parent=11 // pred_region
          %s140 = ssub.s32 16, 16
          %141 = vsyncadd [#allocation6], %s140
          %s143 = sshll.u32 [#allocation7], 4
          %s144 = int_to_ptr.vmem [resolvable:$true] %s143
          %146 = dma.hbm_to_vmem [thread:$0]  %s2, 16, %s144, [#allocation6]
        $region20: #{layernorm_pallas.1} parent=11 // pred_fallthru
          _
      $region12: #{layernorm_pallas.1} parent=5 // pred_fallthru
        _
      %p147 = scmp.lt.s32.totalorder %s16, 4
      // Predicated region
      $region21: #{layernorm_pallas.1} parent=5 // pred_check
        %p148 = pneg %p147
      $region22: #{layernorm_pallas.1} parent=5 // pred_check_branch
        %150 = sbr.rel (%p148) target = $region24
      $region23: #{layernorm_pallas.1} parent=5 // pred_region
        // Predicated region
        $region25: #{layernorm_pallas.1} parent=23 // pred_check
          %p151 = pneg %p36
        $region26: #{layernorm_pallas.1} parent=23 // pred_check_branch
          %153 = sbr.rel (%p151) target = $region28
        $region27: #{layernorm_pallas.1} parent=23 // pred_region
          %s154 = sand.u32 %s26, 1
          %s155 = scalar_lea.sflag [#allocation3], %s154
          %s156 = sand.u32 %s26, 1
          %s157 = smul.addr %s156, 784
          %s158 = scalar_lea.vmem [#allocation2], %s157
          %s159 = smul.u32 98, %s16
          %s161 = ssub.s32 12544, 12544
          %162 = vsyncadd %s155, %s161
          %s163 = smul.addr %s159, 128
          %s164 = scalar_lea.hbm %s0, %s163
          %s165 = sshll.u32 %s158, 4
          %s166 = int_to_ptr.vmem [resolvable:$true] %s165
          %171 = dma.hbm_to_vmem [thread:$0]  %s164, 12544, %s166, %s155, 128, 128, 8
        $region28: #{layernorm_pallas.1} parent=23 // pred_fallthru
          _
      $region24: #{layernorm_pallas.1} parent=5 // pred_fallthru
        _
      %p172 = scmp.le.s32.totalorder 1, %s16
      %p173 = scmp.lt.s32.totalorder %s16, 5
      %p174 = pnand %p172, %p173
      %p175 = pneg %p174
      // Predicated region
      $region29: #{layernorm_pallas.1} parent=5 // pred_check
        _
      $region30: #{layernorm_pallas.1} parent=5 // pred_check_branch
        %177 = sbr.rel (%p174) target = $region32
      $region31: #{layernorm_pallas.1} parent=5 // pred_region
        %s178 = ssub.s32 %s16, 1
        %s179 = sand.u32 %s29, 1
        %s180 = scalar_lea.sflag [#allocation3], %s179
        %s181 = sand.u32 %s29, 1
        %s182 = smul.addr %s181, 784
        %s183 = scalar_lea.vmem [#allocation2], %s182
        // Predicated region
        $region33: #{layernorm_pallas.1} parent=31 // pred_check
          %p184 = pneg %p42
        $region34: #{layernorm_pallas.1} parent=31 // pred_check_branch
          %186 = sbr.rel (%p184) target = $region36
        $region35: #{layernorm_pallas.1} parent=31 // pred_region
          %187 = dma.done %s180, 12544
        $region36: #{layernorm_pallas.1} parent=31 // pred_fallthru
          _
        // Predicated region
        $region37: #{layernorm_pallas.1} parent=31 // pred_check
          %p188 = pneg %p63
        $region38: #{layernorm_pallas.1} parent=31 // pred_check_branch
          %190 = sbr.rel (%p188) target = $region40
        $region39: #{layernorm_pallas.1} parent=31 // pred_region
          %191 = dma.done [#allocation6], 16
        $region40: #{layernorm_pallas.1} parent=31 // pred_fallthru
          _
        // Predicated region
        $region41: #{layernorm_pallas.1} parent=31 // pred_check
          %p192 = pneg %p84
        $region42: #{layernorm_pallas.1} parent=31 // pred_check_branch
          %194 = sbr.rel (%p192) target = $region44
        $region43: #{layernorm_pallas.1} parent=31 // pred_region
          %195 = dma.done [#allocation6], 16
        $region44: #{layernorm_pallas.1} parent=31 // pred_fallthru
          _
        %s196 = sand.u32 %s29, 1
        %s197 = scalar_lea.sflag [#allocation3], %s196
        %s198 = sand.u32 %s29, 1
        %s199 = smul.addr %s198, 784
        %s200 = scalar_lea.vmem [#allocation2], %s199
        %p201 = pneg %p42
        %p202 = pneg %p39
        %p203 = pneg %p63
        %p204 = pneg %p60
        %p205 = pneg %p84
        %p206 = pneg %p81
        %p207 = pneg %p110
        %p208 = pneg %p107
        %s209 = sand.u32 %s97, 1
        %s210 = scalar_lea.sflag [#allocation4], %s209
        %s211 = sand.u32 %s97, 1
        %s212 = smul.addr %s211, 784
        %s213 = scalar_lea.vmem [#allocation8], %s212
        %s214 = smul.u32 98, %s21
        %s215 = smul.u32 98, %s21
        %v216 = vld [vmem:[%s183] sm:$0xff]
        %v217 = vld [vmem:[%s183 + $0x8] sm:$0xff]
        %v218 = vld [vmem:[%s183 + $0x10] sm:$0xff]
        %v219 = vld [vmem:[%s183 + $0x18] sm:$0xff]
        %v220 = vld [vmem:[%s183 + $0x20] sm:$0xff]
        %v221 = vld [vmem:[%s183 + $0x28] sm:$0xff]
        %v222 = vld [vmem:[%s183 + $0x30] sm:$0xff]
        %v223 = vld [vmem:[%s183 + $0x38] sm:$0xff]
        %v224 = vld [vmem:[%s183 + $0x40] sm:$0xff]
        %v225 = vld [vmem:[%s183 + $0x48] sm:$0xff]
        %v226 = vld [vmem:[%s183 + $0x50] sm:$0xff]
        %v227 = vld [vmem:[%s183 + $0x58] sm:$0xff]
        %v228 = vld [vmem:[%s183 + $0x60] sm:$0xff]
        %v229 = vld [vmem:[%s183 + $0x68] sm:$0xff]
        %v230 = vld [vmem:[%s183 + $0x70] sm:$0xff]
        %v231 = vld [vmem:[%s183 + $0x78] sm:$0xff]
        %v232 = vld [vmem:[%s183 + $0x80] sm:$0xff]
        %v233 = vld [vmem:[%s183 + $0x88] sm:$0xff]
        %v234 = vld [vmem:[%s183 + $0x90] sm:$0xff]
        %v235 = vld [vmem:[%s183 + $0x98] sm:$0xff]
        %v236 = vld [vmem:[%s183 + $0xa0] sm:$0xff]
        %v237 = vld [vmem:[%s183 + $0xa8] sm:$0xff]
        %v238 = vld [vmem:[%s183 + $0xb0] sm:$0xff]
        %v239 = vld [vmem:[%s183 + $0xb8] sm:$0xff]
        %v240 = vld [vmem:[%s183 + $0xc0] sm:$0xff]
        %v241 = vld [vmem:[%s183 + $0xc8] sm:$0xff]
        %v242 = vld [vmem:[%s183 + $0xd0] sm:$0xff]
        %v243 = vld [vmem:[%s183 + $0xd8] sm:$0xff]
        %v244 = vld [vmem:[%s183 + $0xe0] sm:$0xff]
        %v245 = vld [vmem:[%s183 + $0xe8] sm:$0xff]
        %v246 = vld [vmem:[%s183 + $0xf0] sm:$0xff]
        %v247 = vld [vmem:[%s183 + $0xf8] sm:$0xff]
        %v248 = vld [vmem:[%s183 + $0x100] sm:$0xff]
        %v249 = vld [vmem:[%s183 + $0x108] sm:$0xff]
        %v250 = vld [vmem:[%s183 + $0x110] sm:$0xff]
        %v251 = vld [vmem:[%s183 + $0x118] sm:$0xff]
        %v252 = vld [vmem:[%s183 + $0x120] sm:$0xff]
        %v253 = vld [vmem:[%s183 + $0x128] sm:$0xff]
        %v254 = vld [vmem:[%s183 + $0x130] sm:$0xff]
        %v255 = vld [vmem:[%s183 + $0x138] sm:$0xff]
        %v256 = vld [vmem:[%s183 + $0x140] sm:$0xff]
        %v257 = vld [vmem:[%s183 + $0x148] sm:$0xff]
        %v258 = vld [vmem:[%s183 + $0x150] sm:$0xff]
        %v259 = vld [vmem:[%s183 + $0x158] sm:$0xff]
        %v260 = vld [vmem:[%s183 + $0x160] sm:$0xff]
        %v261 = vld [vmem:[%s183 + $0x168] sm:$0xff]
        %v262 = vld [vmem:[%s183 + $0x170] sm:$0xff]
        %v263 = vld [vmem:[%s183 + $0x178] sm:$0xff]
        %v264 = vld [vmem:[%s183 + $0x180] sm:$0xff]
        %v265 = vld [vmem:[%s183 + $0x188] sm:$0xff]
        %v266 = vld [vmem:[%s183 + $0x190] sm:$0xff]
        %v267 = vld [vmem:[%s183 + $0x198] sm:$0xff]
        %v268 = vld [vmem:[%s183 + $0x1a0] sm:$0xff]
        %v269 = vld [vmem:[%s183 + $0x1a8] sm:$0xff]
        %v270 = vld [vmem:[%s183 + $0x1b0] sm:$0xff]
        %v271 = vld [vmem:[%s183 + $0x1b8] sm:$0xff]
        %v272 = vld [vmem:[%s183 + $0x1c0] sm:$0xff]
        %v273 = vld [vmem:[%s183 + $0x1c8] sm:$0xff]
        %v274 = vld [vmem:[%s183 + $0x1d0] sm:$0xff]
        %v275 = vld [vmem:[%s183 + $0x1d8] sm:$0xff]
        %v276 = vld [vmem:[%s183 + $0x1e0] sm:$0xff]
        %v277 = vld [vmem:[%s183 + $0x1e8] sm:$0xff]
        %v278 = vld [vmem:[%s183 + $0x1f0] sm:$0xff]
        %v279 = vld [vmem:[%s183 + $0x1f8] sm:$0xff]
        %v280 = vld [vmem:[%s183 + $0x200] sm:$0xff]
        %v281 = vld [vmem:[%s183 + $0x208] sm:$0xff]
        %v282 = vld [vmem:[%s183 + $0x210] sm:$0xff]
        %v283 = vld [vmem:[%s183 + $0x218] sm:$0xff]
        %v284 = vld [vmem:[%s183 + $0x220] sm:$0xff]
        %v285 = vld [vmem:[%s183 + $0x228] sm:$0xff]
        %v286 = vld [vmem:[%s183 + $0x230] sm:$0xff]
        %v287 = vld [vmem:[%s183 + $0x238] sm:$0xff]
        %v288 = vld [vmem:[%s183 + $0x240] sm:$0xff]
        %v289 = vld [vmem:[%s183 + $0x248] sm:$0xff]
        %v290 = vld [vmem:[%s183 + $0x250] sm:$0xff]
        %v291 = vld [vmem:[%s183 + $0x258] sm:$0xff]
        %v292 = vld [vmem:[%s183 + $0x260] sm:$0xff]
        %v293 = vld [vmem:[%s183 + $0x268] sm:$0xff]
        %v294 = vld [vmem:[%s183 + $0x270] sm:$0xff]
        %v295 = vld [vmem:[%s183 + $0x278] sm:$0xff]
        %v296 = vld [vmem:[%s183 + $0x280] sm:$0xff]
        %v297 = vld [vmem:[%s183 + $0x288] sm:$0xff]
        %v298 = vld [vmem:[%s183 + $0x290] sm:$0xff]
        %v299 = vld [vmem:[%s183 + $0x298] sm:$0xff]
        %v300 = vld [vmem:[%s183 + $0x2a0] sm:$0xff]
        %v301 = vld [vmem:[%s183 + $0x2a8] sm:$0xff]
        %v302 = vld [vmem:[%s183 + $0x2b0] sm:$0xff]
        %v303 = vld [vmem:[%s183 + $0x2b8] sm:$0xff]
        %v304 = vld [vmem:[%s183 + $0x2c0] sm:$0xff]
        %v305 = vld [vmem:[%s183 + $0x2c8] sm:$0xff]
        %v306 = vld [vmem:[%s183 + $0x2d0] sm:$0xff]
        %v307 = vld [vmem:[%s183 + $0x2d8] sm:$0xff]
        %v308 = vld [vmem:[%s183 + $0x2e0] sm:$0xff]
        %v309 = vld [vmem:[%s183 + $0x2e8] sm:$0xff]
        %v310 = vld [vmem:[%s183 + $0x2f0] sm:$0xff]
        %v311 = vld [vmem:[%s183 + $0x2f8] sm:$0xff]
        %v312 = vld [vmem:[%s183 + $0x300] sm:$0xff]
        %v313 = vld [vmem:[%s183 + $0x308] sm:$0xff]
        %v314 = vld [vmem:[#allocation5] sm:$0x1]
        %v315 = vld [vmem:[#allocation7] sm:$0x1]
        %316 = vadd.xlane.f32.xlu0 %v216
        %v317 = vpop.xlane.xlu0 %316
        %318 = vadd.xlane.f32.xlu0 %v217
        %v319 = vpop.xlane.xlu0 %318
        %320 = vadd.xlane.f32.xlu0 %v218
        %v321 = vpop.xlane.xlu0 %320
        %322 = vadd.xlane.f32.xlu0 %v219
        %v323 = vpop.xlane.xlu0 %322
        %324 = vadd.xlane.f32.xlu0 %v220
        %v325 = vpop.xlane.xlu0 %324
        %326 = vadd.xlane.f32.xlu0 %v221
        %v327 = vpop.xlane.xlu0 %326
        %328 = vadd.xlane.f32.xlu0 %v222
        %v329 = vpop.xlane.xlu0 %328
        %330 = vadd.xlane.f32.xlu0 %v223
        %v331 = vpop.xlane.xlu0 %330
        %332 = vadd.xlane.f32.xlu0 %v224
        %v333 = vpop.xlane.xlu0 %332
        %334 = vadd.xlane.f32.xlu0 %v225
        %v335 = vpop.xlane.xlu0 %334
        %336 = vadd.xlane.f32.xlu0 %v226
        %v337 = vpop.xlane.xlu0 %336
        %338 = vadd.xlane.f32.xlu0 %v227
        %v339 = vpop.xlane.xlu0 %338
        %340 = vadd.xlane.f32.xlu0 %v228
        %v341 = vpop.xlane.xlu0 %340
        %342 = vadd.xlane.f32.xlu0 %v229
        %v343 = vpop.xlane.xlu0 %342
        %344 = vadd.xlane.f32.xlu0 %v230
        %v345 = vpop.xlane.xlu0 %344
        %346 = vadd.xlane.f32.xlu0 %v231
        %v347 = vpop.xlane.xlu0 %346
        %348 = vadd.xlane.f32.xlu0 %v232
        %v349 = vpop.xlane.xlu0 %348
        %350 = vadd.xlane.f32.xlu0 %v233
        %v351 = vpop.xlane.xlu0 %350
        %352 = vadd.xlane.f32.xlu0 %v234
        %v353 = vpop.xlane.xlu0 %352
        %354 = vadd.xlane.f32.xlu0 %v235
        %v355 = vpop.xlane.xlu0 %354
        %356 = vadd.xlane.f32.xlu0 %v236
        %v357 = vpop.xlane.xlu0 %356
        %358 = vadd.xlane.f32.xlu0 %v237
        %v359 = vpop.xlane.xlu0 %358
        %360 = vadd.xlane.f32.xlu0 %v238
        %v361 = vpop.xlane.xlu0 %360
        %362 = vadd.xlane.f32.xlu0 %v239
        %v363 = vpop.xlane.xlu0 %362
        %364 = vadd.xlane.f32.xlu0 %v240
        %v365 = vpop.xlane.xlu0 %364
        %366 = vadd.xlane.f32.xlu0 %v241
        %v367 = vpop.xlane.xlu0 %366
        %368 = vadd.xlane.f32.xlu0 %v242
        %v369 = vpop.xlane.xlu0 %368
        %370 = vadd.xlane.f32.xlu0 %v243
        %v371 = vpop.xlane.xlu0 %370
        %372 = vadd.xlane.f32.xlu0 %v244
        %v373 = vpop.xlane.xlu0 %372
        %374 = vadd.xlane.f32.xlu0 %v245
        %v375 = vpop.xlane.xlu0 %374
        %376 = vadd.xlane.f32.xlu0 %v246
        %v377 = vpop.xlane.xlu0 %376
        %378 = vadd.xlane.f32.xlu0 %v247
        %v379 = vpop.xlane.xlu0 %378
        %380 = vadd.xlane.f32.xlu0 %v248
        %v381 = vpop.xlane.xlu0 %380
        %382 = vadd.xlane.f32.xlu0 %v249
        %v383 = vpop.xlane.xlu0 %382
        %384 = vadd.xlane.f32.xlu0 %v250
        %v385 = vpop.xlane.xlu0 %384
        %386 = vadd.xlane.f32.xlu0 %v251
        %v387 = vpop.xlane.xlu0 %386
        %388 = vadd.xlane.f32.xlu0 %v252
        %v389 = vpop.xlane.xlu0 %388
        %390 = vadd.xlane.f32.xlu0 %v253
        %v391 = vpop.xlane.xlu0 %390
        %392 = vadd.xlane.f32.xlu0 %v254
        %v393 = vpop.xlane.xlu0 %392
        %394 = vadd.xlane.f32.xlu0 %v255
        %v395 = vpop.xlane.xlu0 %394
        %396 = vadd.xlane.f32.xlu0 %v256
        %v397 = vpop.xlane.xlu0 %396
        %398 = vadd.xlane.f32.xlu0 %v257
        %v399 = vpop.xlane.xlu0 %398
        %400 = vadd.xlane.f32.xlu0 %v258
        %v401 = vpop.xlane.xlu0 %400
        %402 = vadd.xlane.f32.xlu0 %v259
        %v403 = vpop.xlane.xlu0 %402
        %404 = vadd.xlane.f32.xlu0 %v260
        %v405 = vpop.xlane.xlu0 %404
        %406 = vadd.xlane.f32.xlu0 %v261
        %v407 = vpop.xlane.xlu0 %406
        %408 = vadd.xlane.f32.xlu0 %v262
        %v409 = vpop.xlane.xlu0 %408
        %410 = vadd.xlane.f32.xlu0 %v263
        %v411 = vpop.xlane.xlu0 %410
        %412 = vadd.xlane.f32.xlu0 %v264
        %v413 = vpop.xlane.xlu0 %412
        %414 = vadd.xlane.f32.xlu0 %v265
        %v415 = vpop.xlane.xlu0 %414
        %416 = vadd.xlane.f32.xlu0 %v266
        %v417 = vpop.xlane.xlu0 %416
        %418 = vadd.xlane.f32.xlu0 %v267
        %v419 = vpop.xlane.xlu0 %418
        %420 = vadd.xlane.f32.xlu0 %v268
        %v421 = vpop.xlane.xlu0 %420
        %422 = vadd.xlane.f32.xlu0 %v269
        %v423 = vpop.xlane.xlu0 %422
        %424 = vadd.xlane.f32.xlu0 %v270
        %v425 = vpop.xlane.xlu0 %424
        %426 = vadd.xlane.f32.xlu0 %v271
        %v427 = vpop.xlane.xlu0 %426
        %428 = vadd.xlane.f32.xlu0 %v272
        %v429 = vpop.xlane.xlu0 %428
        %430 = vadd.xlane.f32.xlu0 %v273
        %v431 = vpop.xlane.xlu0 %430
        %432 = vadd.xlane.f32.xlu0 %v274
        %v433 = vpop.xlane.xlu0 %432
        %434 = vadd.xlane.f32.xlu0 %v275
        %v435 = vpop.xlane.xlu0 %434
        %436 = vadd.xlane.f32.xlu0 %v276
        %v437 = vpop.xlane.xlu0 %436
        %438 = vadd.xlane.f32.xlu0 %v277
        %v439 = vpop.xlane.xlu0 %438
        %440 = vadd.xlane.f32.xlu0 %v278
        %v441 = vpop.xlane.xlu0 %440
        %442 = vadd.xlane.f32.xlu0 %v279
        %v443 = vpop.xlane.xlu0 %442
        %444 = vadd.xlane.f32.xlu0 %v280
        %v445 = vpop.xlane.xlu0 %444
        %446 = vadd.xlane.f32.xlu0 %v281
        %v447 = vpop.xlane.xlu0 %446
        %448 = vadd.xlane.f32.xlu0 %v282
        %v449 = vpop.xlane.xlu0 %448
        %450 = vadd.xlane.f32.xlu0 %v283
        %v451 = vpop.xlane.xlu0 %450
        %452 = vadd.xlane.f32.xlu0 %v284
        %v453 = vpop.xlane.xlu0 %452
        %454 = vadd.xlane.f32.xlu0 %v285
        %v455 = vpop.xlane.xlu0 %454
        %456 = vadd.xlane.f32.xlu0 %v286
        %v457 = vpop.xlane.xlu0 %456
        %458 = vadd.xlane.f32.xlu0 %v287
        %v459 = vpop.xlane.xlu0 %458
        %460 = vadd.xlane.f32.xlu0 %v288
        %v461 = vpop.xlane.xlu0 %460
        %462 = vadd.xlane.f32.xlu0 %v289
        %v463 = vpop.xlane.xlu0 %462
        %464 = vadd.xlane.f32.xlu0 %v290
        %v465 = vpop.xlane.xlu0 %464
        %466 = vadd.xlane.f32.xlu0 %v291
        %v467 = vpop.xlane.xlu0 %466
        %468 = vadd.xlane.f32.xlu0 %v292
        %v469 = vpop.xlane.xlu0 %468
        %470 = vadd.xlane.f32.xlu0 %v293
        %v471 = vpop.xlane.xlu0 %470
        %472 = vadd.xlane.f32.xlu0 %v294
        %v473 = vpop.xlane.xlu0 %472
        %474 = vadd.xlane.f32.xlu0 %v295
        %v475 = vpop.xlane.xlu0 %474
        %476 = vadd.xlane.f32.xlu0 %v296
        %v477 = vpop.xlane.xlu0 %476
        %478 = vadd.xlane.f32.xlu0 %v297
        %v479 = vpop.xlane.xlu0 %478
        %480 = vadd.xlane.f32.xlu0 %v298
        %v481 = vpop.xlane.xlu0 %480
        %482 = vadd.xlane.f32.xlu0 %v299
        %v483 = vpop.xlane.xlu0 %482
        %484 = vadd.xlane.f32.xlu0 %v300
        %v485 = vpop.xlane.xlu0 %484
        %486 = vadd.xlane.f32.xlu0 %v301
        %v487 = vpop.xlane.xlu0 %486
        %488 = vadd.xlane.f32.xlu0 %v302
        %v489 = vpop.xlane.xlu0 %488
        %490 = vadd.xlane.f32.xlu0 %v303
        %v491 = vpop.xlane.xlu0 %490
        %492 = vadd.xlane.f32.xlu0 %v304
        %v493 = vpop.xlane.xlu0 %492
        %494 = vadd.xlane.f32.xlu0 %v305
        %v495 = vpop.xlane.xlu0 %494
        %496 = vadd.xlane.f32.xlu0 %v306
        %v497 = vpop.xlane.xlu0 %496
        %498 = vadd.xlane.f32.xlu0 %v307
        %v499 = vpop.xlane.xlu0 %498
        %500 = vadd.xlane.f32.xlu0 %v308
        %v501 = vpop.xlane.xlu0 %500
        %502 = vadd.xlane.f32.xlu0 %v309
        %v503 = vpop.xlane.xlu0 %502
        %504 = vadd.xlane.f32.xlu0 %v310
        %v505 = vpop.xlane.xlu0 %504
        %506 = vadd.xlane.f32.xlu0 %v311
        %v507 = vpop.xlane.xlu0 %506
        %508 = vadd.xlane.f32.xlu0 %v312
        %v509 = vpop.xlane.xlu0 %508
        %510 = vadd.xlane.f32.xlu0 %v313
        %v511 = vpop.xlane.xlu0 %510
        %v512 = vmul.f32 %v317, 0.0078125
        %v513 = vmul.f32 %v319, 0.0078125
        %v514 = vmul.f32 %v321, 0.0078125
        %v515 = vmul.f32 %v323, 0.0078125
        %v516 = vmul.f32 %v325, 0.0078125
        %v517 = vmul.f32 %v327, 0.0078125
        %v518 = vmul.f32 %v329, 0.0078125
        %v519 = vmul.f32 %v331, 0.0078125
        %v520 = vmul.f32 %v333, 0.0078125
        %v521 = vmul.f32 %v335, 0.0078125
        %v522 = vmul.f32 %v337, 0.0078125
        %v523 = vmul.f32 %v339, 0.0078125
        %v524 = vmul.f32 %v341, 0.0078125
        %v525 = vmul.f32 %v343, 0.0078125
        %v526 = vmul.f32 %v345, 0.0078125
        %v527 = vmul.f32 %v347, 0.0078125
        %v528 = vmul.f32 %v349, 0.0078125
        %v529 = vmul.f32 %v351, 0.0078125
        %v530 = vmul.f32 %v353, 0.0078125
        %v531 = vmul.f32 %v355, 0.0078125
        %v532 = vmul.f32 %v357, 0.0078125
        %v533 = vmul.f32 %v359, 0.0078125
        %v534 = vmul.f32 %v361, 0.0078125
        %v535 = vmul.f32 %v363, 0.0078125
        %v536 = vmul.f32 %v365, 0.0078125
        %v537 = vmul.f32 %v367, 0.0078125
        %v538 = vmul.f32 %v369, 0.0078125
        %v539 = vmul.f32 %v371, 0.0078125
        %v540 = vmul.f32 %v373, 0.0078125
        %v541 = vmul.f32 %v375, 0.0078125
        %v542 = vmul.f32 %v377, 0.0078125
        %v543 = vmul.f32 %v379, 0.0078125
        %v544 = vmul.f32 %v381, 0.0078125
        %v545 = vmul.f32 %v383, 0.0078125
        %v546 = vmul.f32 %v385, 0.0078125
        %v547 = vmul.f32 %v387, 0.0078125
        %v548 = vmul.f32 %v389, 0.0078125
        %v549 = vmul.f32 %v391, 0.0078125
        %v550 = vmul.f32 %v393, 0.0078125
        %v551 = vmul.f32 %v395, 0.0078125
        %v552 = vmul.f32 %v397, 0.0078125
        %v553 = vmul.f32 %v399, 0.0078125
        %v554 = vmul.f32 %v401, 0.0078125
        %v555 = vmul.f32 %v403, 0.0078125
        %v556 = vmul.f32 %v405, 0.0078125
        %v557 = vmul.f32 %v407, 0.0078125
        %v558 = vmul.f32 %v409, 0.0078125
        %v559 = vmul.f32 %v411, 0.0078125
        %v560 = vmul.f32 %v413, 0.0078125
        %v561 = vmul.f32 %v415, 0.0078125
        %v562 = vmul.f32 %v417, 0.0078125
        %v563 = vmul.f32 %v419, 0.0078125
        %v564 = vmul.f32 %v421, 0.0078125
        %v565 = vmul.f32 %v423, 0.0078125
        %v566 = vmul.f32 %v425, 0.0078125
        %v567 = vmul.f32 %v427, 0.0078125
        %v568 = vmul.f32 %v429, 0.0078125
        %v569 = vmul.f32 %v431, 0.0078125
        %v570 = vmul.f32 %v433, 0.0078125
        %v571 = vmul.f32 %v435, 0.0078125
        %v572 = vmul.f32 %v437, 0.0078125
        %v573 = vmul.f32 %v439, 0.0078125
        %v574 = vmul.f32 %v441, 0.0078125
        %v575 = vmul.f32 %v443, 0.0078125
        %v576 = vmul.f32 %v445, 0.0078125
        %v577 = vmul.f32 %v447, 0.0078125
        %v578 = vmul.f32 %v449, 0.0078125
        %v579 = vmul.f32 %v451, 0.0078125
        %v580 = vmul.f32 %v453, 0.0078125
        %v581 = vmul.f32 %v455, 0.0078125
        %v582 = vmul.f32 %v457, 0.0078125
        %v583 = vmul.f32 %v459, 0.0078125
        %v584 = vmul.f32 %v461, 0.0078125
        %v585 = vmul.f32 %v463, 0.0078125
        %v586 = vmul.f32 %v465, 0.0078125
        %v587 = vmul.f32 %v467, 0.0078125
        %v588 = vmul.f32 %v469, 0.0078125
        %v589 = vmul.f32 %v471, 0.0078125
        %v590 = vmul.f32 %v473, 0.0078125
        %v591 = vmul.f32 %v475, 0.0078125
        %v592 = vmul.f32 %v477, 0.0078125
        %v593 = vmul.f32 %v479, 0.0078125
        %v594 = vmul.f32 %v481, 0.0078125
        %v595 = vmul.f32 %v483, 0.0078125
        %v596 = vmul.f32 %v485, 0.0078125
        %v597 = vmul.f32 %v487, 0.0078125
        %v598 = vmul.f32 %v489, 0.0078125
        %v599 = vmul.f32 %v491, 0.0078125
        %v600 = vmul.f32 %v493, 0.0078125
        %v601 = vmul.f32 %v495, 0.0078125
        %v602 = vmul.f32 %v497, 0.0078125
        %v603 = vmul.f32 %v499, 0.0078125
        %v604 = vmul.f32 %v501, 0.0078125
        %v605 = vmul.f32 %v503, 0.0078125
        %v606 = vmul.f32 %v505, 0.0078125
        %v607 = vmul.f32 %v507, 0.0078125
        %v608 = vmul.f32 %v509, 0.0078125
        %v609 = vmul.f32 %v511, 0.0078125
        %v610 = vsub.f32 %v216, %v512
        %v611 = vsub.f32 %v217, %v513
        %v612 = vsub.f32 %v218, %v514
        %v613 = vsub.f32 %v219, %v515
        %v614 = vsub.f32 %v220, %v516
        %v615 = vsub.f32 %v221, %v517
        %v616 = vsub.f32 %v222, %v518
        %v617 = vsub.f32 %v223, %v519
        %v618 = vsub.f32 %v224, %v520
        %v619 = vsub.f32 %v225, %v521
        %v620 = vsub.f32 %v226, %v522
        %v621 = vsub.f32 %v227, %v523
        %v622 = vsub.f32 %v228, %v524
        %v623 = vsub.f32 %v229, %v525
        %v624 = vsub.f32 %v230, %v526
        %v625 = vsub.f32 %v231, %v527
        %v626 = vsub.f32 %v232, %v528
        %v627 = vsub.f32 %v233, %v529
        %v628 = vsub.f32 %v234, %v530
        %v629 = vsub.f32 %v235, %v531
        %v630 = vsub.f32 %v236, %v532
        %v631 = vsub.f32 %v237, %v533
        %v632 = vsub.f32 %v238, %v534
        %v633 = vsub.f32 %v239, %v535
        %v634 = vsub.f32 %v240, %v536
        %v635 = vsub.f32 %v241, %v537
        %v636 = vsub.f32 %v242, %v538
        %v637 = vsub.f32 %v243, %v539
        %v638 = vsub.f32 %v244, %v540
        %v639 = vsub.f32 %v245, %v541
        %v640 = vsub.f32 %v246, %v542
        %v641 = vsub.f32 %v247, %v543
        %v642 = vsub.f32 %v248, %v544
        %v643 = vsub.f32 %v249, %v545
        %v644 = vsub.f32 %v250, %v546
        %v645 = vsub.f32 %v251, %v547
        %v646 = vsub.f32 %v252, %v548
        %v647 = vsub.f32 %v253, %v549
        %v648 = vsub.f32 %v254, %v550
        %v649 = vsub.f32 %v255, %v551
        %v650 = vsub.f32 %v256, %v552
        %v651 = vsub.f32 %v257, %v553
        %v652 = vsub.f32 %v258, %v554
        %v653 = vsub.f32 %v259, %v555
        %v654 = vsub.f32 %v260, %v556
        %v655 = vsub.f32 %v261, %v557
        %v656 = vsub.f32 %v262, %v558
        %v657 = vsub.f32 %v263, %v559
        %v658 = vsub.f32 %v264, %v560
        %v659 = vsub.f32 %v265, %v561
        %v660 = vsub.f32 %v266, %v562
        %v661 = vsub.f32 %v267, %v563
        %v662 = vsub.f32 %v268, %v564
        %v663 = vsub.f32 %v269, %v565
        %v664 = vsub.f32 %v270, %v566
        %v665 = vsub.f32 %v271, %v567
        %v666 = vsub.f32 %v272, %v568
        %v667 = vsub.f32 %v273, %v569
        %v668 = vsub.f32 %v274, %v570
        %v669 = vsub.f32 %v275, %v571
        %v670 = vsub.f32 %v276, %v572
        %v671 = vsub.f32 %v277, %v573
        %v672 = vsub.f32 %v278, %v574
        %v673 = vsub.f32 %v279, %v575
        %v674 = vsub.f32 %v280, %v576
        %v675 = vsub.f32 %v281, %v577
        %v676 = vsub.f32 %v282, %v578
        %v677 = vsub.f32 %v283, %v579
        %v678 = vsub.f32 %v284, %v580
        %v679 = vsub.f32 %v285, %v581
        %v680 = vsub.f32 %v286, %v582
        %v681 = vsub.f32 %v287, %v583
        %v682 = vsub.f32 %v288, %v584
        %v683 = vsub.f32 %v289, %v585
        %v684 = vsub.f32 %v290, %v586
        %v685 = vsub.f32 %v291, %v587
        %v686 = vsub.f32 %v292, %v588
        %v687 = vsub.f32 %v293, %v589
        %v688 = vsub.f32 %v294, %v590
        %v689 = vsub.f32 %v295, %v591
        %v690 = vsub.f32 %v296, %v592
        %v691 = vsub.f32 %v297, %v593
        %v692 = vsub.f32 %v298, %v594
        %v693 = vsub.f32 %v299, %v595
        %v694 = vsub.f32 %v300, %v596
        %v695 = vsub.f32 %v301, %v597
        %v696 = vsub.f32 %v302, %v598
        %v697 = vsub.f32 %v303, %v599
        %v698 = vsub.f32 %v304, %v600
        %v699 = vsub.f32 %v305, %v601
        %v700 = vsub.f32 %v306, %v602
        %v701 = vsub.f32 %v307, %v603
        %v702 = vsub.f32 %v308, %v604
        %v703 = vsub.f32 %v309, %v605
        %v704 = vsub.f32 %v310, %v606
        %v705 = vsub.f32 %v311, %v607
        %v706 = vsub.f32 %v312, %v608
        %v707 = vsub.f32 %v313, %v609
        %v708 = vmul.f32 %v610, %v610
        %v709 = vmul.f32 %v611, %v611
        %v710 = vmul.f32 %v612, %v612
        %v711 = vmul.f32 %v613, %v613
        %v712 = vmul.f32 %v614, %v614
        %v713 = vmul.f32 %v615, %v615
        %v714 = vmul.f32 %v616, %v616
        %v715 = vmul.f32 %v617, %v617
        %v716 = vmul.f32 %v618, %v618
        %v717 = vmul.f32 %v619, %v619
        %v718 = vmul.f32 %v620, %v620
        %v719 = vmul.f32 %v621, %v621
        %v720 = vmul.f32 %v622, %v622
        %v721 = vmul.f32 %v623, %v623
        %v722 = vmul.f32 %v624, %v624
        %v723 = vmul.f32 %v625, %v625
        %v724 = vmul.f32 %v626, %v626
        %v725 = vmul.f32 %v627, %v627
        %v726 = vmul.f32 %v628, %v628
        %v727 = vmul.f32 %v629, %v629
        %v728 = vmul.f32 %v630, %v630
        %v729 = vmul.f32 %v631, %v631
        %v730 = vmul.f32 %v632, %v632
        %v731 = vmul.f32 %v633, %v633
        %v732 = vmul.f32 %v634, %v634
        %v733 = vmul.f32 %v635, %v635
        %v734 = vmul.f32 %v636, %v636
        %v735 = vmul.f32 %v637, %v637
        %v736 = vmul.f32 %v638, %v638
        %v737 = vmul.f32 %v639, %v639
        %v738 = vmul.f32 %v640, %v640
        %v739 = vmul.f32 %v641, %v641
        %v740 = vmul.f32 %v642, %v642
        %v741 = vmul.f32 %v643, %v643
        %v742 = vmul.f32 %v644, %v644
        %v743 = vmul.f32 %v645, %v645
        %v744 = vmul.f32 %v646, %v646
        %v745 = vmul.f32 %v647, %v647
        %v746 = vmul.f32 %v648, %v648
        %v747 = vmul.f32 %v649, %v649
        %v748 = vmul.f32 %v650, %v650
        %v749 = vmul.f32 %v651, %v651
        %v750 = vmul.f32 %v652, %v652
        %v751 = vmul.f32 %v653, %v653
        %v752 = vmul.f32 %v654, %v654
        %v753 = vmul.f32 %v655, %v655
        %v754 = vmul.f32 %v656, %v656
        %v755 = vmul.f32 %v657, %v657
        %v756 = vmul.f32 %v658, %v658
        %v757 = vmul.f32 %v659, %v659
        %v758 = vmul.f32 %v660, %v660
        %v759 = vmul.f32 %v661, %v661
        %v760 = vmul.f32 %v662, %v662
        %v761 = vmul.f32 %v663, %v663
        %v762 = vmul.f32 %v664, %v664
        %v763 = vmul.f32 %v665, %v665
        %v764 = vmul.f32 %v666, %v666
        %v765 = vmul.f32 %v667, %v667
        %v766 = vmul.f32 %v668, %v668
        %v767 = vmul.f32 %v669, %v669
        %v768 = vmul.f32 %v670, %v670
        %v769 = vmul.f32 %v671, %v671
        %v770 = vmul.f32 %v672, %v672
        %v771 = vmul.f32 %v673, %v673
        %v772 = vmul.f32 %v674, %v674
        %v773 = vmul.f32 %v675, %v675
        %v774 = vmul.f32 %v676, %v676
        %v775 = vmul.f32 %v677, %v677
        %v776 = vmul.f32 %v678, %v678
        %v777 = vmul.f32 %v679, %v679
        %v778 = vmul.f32 %v680, %v680
        %v779 = vmul.f32 %v681, %v681
        %v780 = vmul.f32 %v682, %v682
        %v781 = vmul.f32 %v683, %v683
        %v782 = vmul.f32 %v684, %v684
        %v783 = vmul.f32 %v685, %v685
        %v784 = vmul.f32 %v686, %v686
        %v785 = vmul.f32 %v687, %v687
        %v786 = vmul.f32 %v688, %v688
        %v787 = vmul.f32 %v689, %v689
        %v788 = vmul.f32 %v690, %v690
        %v789 = vmul.f32 %v691, %v691
        %v790 = vmul.f32 %v692, %v692
        %v791 = vmul.f32 %v693, %v693
        %v792 = vmul.f32 %v694, %v694
        %v793 = vmul.f32 %v695, %v695
        %v794 = vmul.f32 %v696, %v696
        %v795 = vmul.f32 %v697, %v697
        %v796 = vmul.f32 %v698, %v698
        %v797 = vmul.f32 %v699, %v699
        %v798 = vmul.f32 %v700, %v700
        %v799 = vmul.f32 %v701, %v701
        %v800 = vmul.f32 %v702, %v702
        %v801 = vmul.f32 %v703, %v703
        %v802 = vmul.f32 %v704, %v704
        %v803 = vmul.f32 %v705, %v705
        %v804 = vmul.f32 %v706, %v706
        %v805 = vmul.f32 %v707, %v707
        %806 = vadd.xlane.f32.xlu0 %v708
        %v807 = vpop.xlane.xlu0 %806
        %808 = vadd.xlane.f32.xlu0 %v709
        %v809 = vpop.xlane.xlu0 %808
        %810 = vadd.xlane.f32.xlu0 %v710
        %v811 = vpop.xlane.xlu0 %810
        %812 = vadd.xlane.f32.xlu0 %v711
        %v813 = vpop.xlane.xlu0 %812
        %814 = vadd.xlane.f32.xlu0 %v712
        %v815 = vpop.xlane.xlu0 %814
        %816 = vadd.xlane.f32.xlu0 %v713
        %v817 = vpop.xlane.xlu0 %816
        %818 = vadd.xlane.f32.xlu0 %v714
        %v819 = vpop.xlane.xlu0 %818
        %820 = vadd.xlane.f32.xlu0 %v715
        %v821 = vpop.xlane.xlu0 %820
        %822 = vadd.xlane.f32.xlu0 %v716
        %v823 = vpop.xlane.xlu0 %822
        %824 = vadd.xlane.f32.xlu0 %v717
        %v825 = vpop.xlane.xlu0 %824
        %826 = vadd.xlane.f32.xlu0 %v718
        %v827 = vpop.xlane.xlu0 %826
        %828 = vadd.xlane.f32.xlu0 %v719
        %v829 = vpop.xlane.xlu0 %828
        %830 = vadd.xlane.f32.xlu0 %v720
        %v831 = vpop.xlane.xlu0 %830
        %832 = vadd.xlane.f32.xlu0 %v721
        %v833 = vpop.xlane.xlu0 %832
        %834 = vadd.xlane.f32.xlu0 %v722
        %v835 = vpop.xlane.xlu0 %834
        %836 = vadd.xlane.f32.xlu0 %v723
        %v837 = vpop.xlane.xlu0 %836
        %838 = vadd.xlane.f32.xlu0 %v724
        %v839 = vpop.xlane.xlu0 %838
        %840 = vadd.xlane.f32.xlu0 %v725
        %v841 = vpop.xlane.xlu0 %840
        %842 = vadd.xlane.f32.xlu0 %v726
        %v843 = vpop.xlane.xlu0 %842
        %844 = vadd.xlane.f32.xlu0 %v727
        %v845 = vpop.xlane.xlu0 %844
        %846 = vadd.xlane.f32.xlu0 %v728
        %v847 = vpop.xlane.xlu0 %846
        %848 = vadd.xlane.f32.xlu0 %v729
        %v849 = vpop.xlane.xlu0 %848
        %850 = vadd.xlane.f32.xlu0 %v730
        %v851 = vpop.xlane.xlu0 %850
        %852 = vadd.xlane.f32.xlu0 %v731
        %v853 = vpop.xlane.xlu0 %852
        %854 = vadd.xlane.f32.xlu0 %v732
        %v855 = vpop.xlane.xlu0 %854
        %856 = vadd.xlane.f32.xlu0 %v733
        %v857 = vpop.xlane.xlu0 %856
        %858 = vadd.xlane.f32.xlu0 %v734
        %v859 = vpop.xlane.xlu0 %858
        %860 = vadd.xlane.f32.xlu0 %v735
        %v861 = vpop.xlane.xlu0 %860
        %862 = vadd.xlane.f32.xlu0 %v736
        %v863 = vpop.xlane.xlu0 %862
        %864 = vadd.xlane.f32.xlu0 %v737
        %v865 = vpop.xlane.xlu0 %864
        %866 = vadd.xlane.f32.xlu0 %v738
        %v867 = vpop.xlane.xlu0 %866
        %868 = vadd.xlane.f32.xlu0 %v739
        %v869 = vpop.xlane.xlu0 %868
        %870 = vadd.xlane.f32.xlu0 %v740
        %v871 = vpop.xlane.xlu0 %870
        %872 = vadd.xlane.f32.xlu0 %v741
        %v873 = vpop.xlane.xlu0 %872
        %874 = vadd.xlane.f32.xlu0 %v742
        %v875 = vpop.xlane.xlu0 %874
        %876 = vadd.xlane.f32.xlu0 %v743
        %v877 = vpop.xlane.xlu0 %876
        %878 = vadd.xlane.f32.xlu0 %v744
        %v879 = vpop.xlane.xlu0 %878
        %880 = vadd.xlane.f32.xlu0 %v745
        %v881 = vpop.xlane.xlu0 %880
        %882 = vadd.xlane.f32.xlu0 %v746
        %v883 = vpop.xlane.xlu0 %882
        %884 = vadd.xlane.f32.xlu0 %v747
        %v885 = vpop.xlane.xlu0 %884
        %886 = vadd.xlane.f32.xlu0 %v748
        %v887 = vpop.xlane.xlu0 %886
        %888 = vadd.xlane.f32.xlu0 %v749
        %v889 = vpop.xlane.xlu0 %888
        %890 = vadd.xlane.f32.xlu0 %v750
        %v891 = vpop.xlane.xlu0 %890
        %892 = vadd.xlane.f32.xlu0 %v751
        %v893 = vpop.xlane.xlu0 %892
        %894 = vadd.xlane.f32.xlu0 %v752
        %v895 = vpop.xlane.xlu0 %894
        %896 = vadd.xlane.f32.xlu0 %v753
        %v897 = vpop.xlane.xlu0 %896
        %898 = vadd.xlane.f32.xlu0 %v754
        %v899 = vpop.xlane.xlu0 %898
        %900 = vadd.xlane.f32.xlu0 %v755
        %v901 = vpop.xlane.xlu0 %900
        %902 = vadd.xlane.f32.xlu0 %v756
        %v903 = vpop.xlane.xlu0 %902
        %904 = vadd.xlane.f32.xlu0 %v757
        %v905 = vpop.xlane.xlu0 %904
        %906 = vadd.xlane.f32.xlu0 %v758
        %v907 = vpop.xlane.xlu0 %906
        %908 = vadd.xlane.f32.xlu0 %v759
        %v909 = vpop.xlane.xlu0 %908
        %910 = vadd.xlane.f32.xlu0 %v760
        %v911 = vpop.xlane.xlu0 %910
        %912 = vadd.xlane.f32.xlu0 %v761
        %v913 = vpop.xlane.xlu0 %912
        %914 = vadd.xlane.f32.xlu0 %v762
        %v915 = vpop.xlane.xlu0 %914
        %916 = vadd.xlane.f32.xlu0 %v763
        %v917 = vpop.xlane.xlu0 %916
        %918 = vadd.xlane.f32.xlu0 %v764
        %v919 = vpop.xlane.xlu0 %918
        %920 = vadd.xlane.f32.xlu0 %v765
        %v921 = vpop.xlane.xlu0 %920
        %922 = vadd.xlane.f32.xlu0 %v766
        %v923 = vpop.xlane.xlu0 %922
        %924 = vadd.xlane.f32.xlu0 %v767
        %v925 = vpop.xlane.xlu0 %924
        %926 = vadd.xlane.f32.xlu0 %v768
        %v927 = vpop.xlane.xlu0 %926
        %928 = vadd.xlane.f32.xlu0 %v769
        %v929 = vpop.xlane.xlu0 %928
        %930 = vadd.xlane.f32.xlu0 %v770
        %v931 = vpop.xlane.xlu0 %930
        %932 = vadd.xlane.f32.xlu0 %v771
        %v933 = vpop.xlane.xlu0 %932
        %934 = vadd.xlane.f32.xlu0 %v772
        %v935 = vpop.xlane.xlu0 %934
        %936 = vadd.xlane.f32.xlu0 %v773
        %v937 = vpop.xlane.xlu0 %936
        %938 = vadd.xlane.f32.xlu0 %v774
        %v939 = vpop.xlane.xlu0 %938
        %940 = vadd.xlane.f32.xlu0 %v775
        %v941 = vpop.xlane.xlu0 %940
        %942 = vadd.xlane.f32.xlu0 %v776
        %v943 = vpop.xlane.xlu0 %942
        %944 = vadd.xlane.f32.xlu0 %v777
        %v945 = vpop.xlane.xlu0 %944
        %946 = vadd.xlane.f32.xlu0 %v778
        %v947 = vpop.xlane.xlu0 %946
        %948 = vadd.xlane.f32.xlu0 %v779
        %v949 = vpop.xlane.xlu0 %948
        %950 = vadd.xlane.f32.xlu0 %v780
        %v951 = vpop.xlane.xlu0 %950
        %952 = vadd.xlane.f32.xlu0 %v781
        %v953 = vpop.xlane.xlu0 %952
        %954 = vadd.xlane.f32.xlu0 %v782
        %v955 = vpop.xlane.xlu0 %954
        %956 = vadd.xlane.f32.xlu0 %v783
        %v957 = vpop.xlane.xlu0 %956
        %958 = vadd.xlane.f32.xlu0 %v784
        %v959 = vpop.xlane.xlu0 %958
        %960 = vadd.xlane.f32.xlu0 %v785
        %v961 = vpop.xlane.xlu0 %960
        %962 = vadd.xlane.f32.xlu0 %v786
        %v963 = vpop.xlane.xlu0 %962
        %964 = vadd.xlane.f32.xlu0 %v787
        %v965 = vpop.xlane.xlu0 %964
        %966 = vadd.xlane.f32.xlu0 %v788
        %v967 = vpop.xlane.xlu0 %966
        %968 = vadd.xlane.f32.xlu0 %v789
        %v969 = vpop.xlane.xlu0 %968
        %970 = vadd.xlane.f32.xlu0 %v790
        %v971 = vpop.xlane.xlu0 %970
        %972 = vadd.xlane.f32.xlu0 %v791
        %v973 = vpop.xlane.xlu0 %972
        %974 = vadd.xlane.f32.xlu0 %v792
        %v975 = vpop.xlane.xlu0 %974
        %976 = vadd.xlane.f32.xlu0 %v793
        %v977 = vpop.xlane.xlu0 %976
        %978 = vadd.xlane.f32.xlu0 %v794
        %v979 = vpop.xlane.xlu0 %978
        %980 = vadd.xlane.f32.xlu0 %v795
        %v981 = vpop.xlane.xlu0 %980
        %982 = vadd.xlane.f32.xlu0 %v796
        %v983 = vpop.xlane.xlu0 %982
        %984 = vadd.xlane.f32.xlu0 %v797
        %v985 = vpop.xlane.xlu0 %984
        %986 = vadd.xlane.f32.xlu0 %v798
        %v987 = vpop.xlane.xlu0 %986
        %988 = vadd.xlane.f32.xlu0 %v799
        %v989 = vpop.xlane.xlu0 %988
        %990 = vadd.xlane.f32.xlu0 %v800
        %v991 = vpop.xlane.xlu0 %990
        %992 = vadd.xlane.f32.xlu0 %v801
        %v993 = vpop.xlane.xlu0 %992
        %994 = vadd.xlane.f32.xlu0 %v802
        %v995 = vpop.xlane.xlu0 %994
        %996 = vadd.xlane.f32.xlu0 %v803
        %v997 = vpop.xlane.xlu0 %996
        %998 = vadd.xlane.f32.xlu0 %v804
        %v999 = vpop.xlane.xlu0 %998
        %1000 = vadd.xlane.f32.xlu0 %v805
        %v1001 = vpop.xlane.xlu0 %1000
        %v1002 = vmul.f32 %v807, 0.0078125
        %v1003 = vmul.f32 %v809, 0.0078125
        %v1004 = vmul.f32 %v811, 0.0078125
        %v1005 = vmul.f32 %v813, 0.0078125
        %v1006 = vmul.f32 %v815, 0.0078125
        %v1007 = vmul.f32 %v817, 0.0078125
        %v1008 = vmul.f32 %v819, 0.0078125
        %v1009 = vmul.f32 %v821, 0.0078125
        %v1010 = vmul.f32 %v823, 0.0078125
        %v1011 = vmul.f32 %v825, 0.0078125
        %v1012 = vmul.f32 %v827, 0.0078125
        %v1013 = vmul.f32 %v829, 0.0078125
        %v1014 = vmul.f32 %v831, 0.0078125
        %v1015 = vmul.f32 %v833, 0.0078125
        %v1016 = vmul.f32 %v835, 0.0078125
        %v1017 = vmul.f32 %v837, 0.0078125
        %v1018 = vmul.f32 %v839, 0.0078125
        %v1019 = vmul.f32 %v841, 0.0078125
        %v1020 = vmul.f32 %v843, 0.0078125
        %v1021 = vmul.f32 %v845, 0.0078125
        %v1022 = vmul.f32 %v847, 0.0078125
        %v1023 = vmul.f32 %v849, 0.0078125
        %v1024 = vmul.f32 %v851, 0.0078125
        %v1025 = vmul.f32 %v853, 0.0078125
        %v1026 = vmul.f32 %v855, 0.0078125
        %v1027 = vmul.f32 %v857, 0.0078125
        %v1028 = vmul.f32 %v859, 0.0078125
        %v1029 = vmul.f32 %v861, 0.0078125
        %v1030 = vmul.f32 %v863, 0.0078125
        %v1031 = vmul.f32 %v865, 0.0078125
        %v1032 = vmul.f32 %v867, 0.0078125
        %v1033 = vmul.f32 %v869, 0.0078125
        %v1034 = vmul.f32 %v871, 0.0078125
        %v1035 = vmul.f32 %v873, 0.0078125
        %v1036 = vmul.f32 %v875, 0.0078125
        %v1037 = vmul.f32 %v877, 0.0078125
        %v1038 = vmul.f32 %v879, 0.0078125
        %v1039 = vmul.f32 %v881, 0.0078125
        %v1040 = vmul.f32 %v883, 0.0078125
        %v1041 = vmul.f32 %v885, 0.0078125
        %v1042 = vmul.f32 %v887, 0.0078125
        %v1043 = vmul.f32 %v889, 0.0078125
        %v1044 = vmul.f32 %v891, 0.0078125
        %v1045 = vmul.f32 %v893, 0.0078125
        %v1046 = vmul.f32 %v895, 0.0078125
        %v1047 = vmul.f32 %v897, 0.0078125
        %v1048 = vmul.f32 %v899, 0.0078125
        %v1049 = vmul.f32 %v901, 0.0078125
        %v1050 = vmul.f32 %v903, 0.0078125
        %v1051 = vmul.f32 %v905, 0.0078125
        %v1052 = vmul.f32 %v907, 0.0078125
        %v1053 = vmul.f32 %v909, 0.0078125
        %v1054 = vmul.f32 %v911, 0.0078125
        %v1055 = vmul.f32 %v913, 0.0078125
        %v1056 = vmul.f32 %v915, 0.0078125
        %v1057 = vmul.f32 %v917, 0.0078125
        %v1058 = vmul.f32 %v919, 0.0078125
        %v1059 = vmul.f32 %v921, 0.0078125
        %v1060 = vmul.f32 %v923, 0.0078125
        %v1061 = vmul.f32 %v925, 0.0078125
        %v1062 = vmul.f32 %v927, 0.0078125
        %v1063 = vmul.f32 %v929, 0.0078125
        %v1064 = vmul.f32 %v931, 0.0078125
        %v1065 = vmul.f32 %v933, 0.0078125
        %v1066 = vmul.f32 %v935, 0.0078125
        %v1067 = vmul.f32 %v937, 0.0078125
        %v1068 = vmul.f32 %v939, 0.0078125
        %v1069 = vmul.f32 %v941, 0.0078125
        %v1070 = vmul.f32 %v943, 0.0078125
        %v1071 = vmul.f32 %v945, 0.0078125
        %v1072 = vmul.f32 %v947, 0.0078125
        %v1073 = vmul.f32 %v949, 0.0078125
        %v1074 = vmul.f32 %v951, 0.0078125
        %v1075 = vmul.f32 %v953, 0.0078125
        %v1076 = vmul.f32 %v955, 0.0078125
        %v1077 = vmul.f32 %v957, 0.0078125
        %v1078 = vmul.f32 %v959, 0.0078125
        %v1079 = vmul.f32 %v961, 0.0078125
        %v1080 = vmul.f32 %v963, 0.0078125
        %v1081 = vmul.f32 %v965, 0.0078125
        %v1082 = vmul.f32 %v967, 0.0078125
        %v1083 = vmul.f32 %v969, 0.0078125
        %v1084 = vmul.f32 %v971, 0.0078125
        %v1085 = vmul.f32 %v973, 0.0078125
        %v1086 = vmul.f32 %v975, 0.0078125
        %v1087 = vmul.f32 %v977, 0.0078125
        %v1088 = vmul.f32 %v979, 0.0078125
        %v1089 = vmul.f32 %v981, 0.0078125
        %v1090 = vmul.f32 %v983, 0.0078125
        %v1091 = vmul.f32 %v985, 0.0078125
        %v1092 = vmul.f32 %v987, 0.0078125
        %v1093 = vmul.f32 %v989, 0.0078125
        %v1094 = vmul.f32 %v991, 0.0078125
        %v1095 = vmul.f32 %v993, 0.0078125
        %v1096 = vmul.f32 %v995, 0.0078125
        %v1097 = vmul.f32 %v997, 0.0078125
        %v1098 = vmul.f32 %v999, 0.0078125
        %v1099 = vmul.f32 %v1001, 0.0078125
        %v1100 = vadd.f32 %v1002, 1e-05
        %v1101 = vadd.f32 %v1003, 1e-05
        %v1102 = vadd.f32 %v1004, 1e-05
        %v1103 = vadd.f32 %v1005, 1e-05
        %v1104 = vadd.f32 %v1006, 1e-05
        %v1105 = vadd.f32 %v1007, 1e-05
        %v1106 = vadd.f32 %v1008, 1e-05
        %v1107 = vadd.f32 %v1009, 1e-05
        %v1108 = vadd.f32 %v1010, 1e-05
        %v1109 = vadd.f32 %v1011, 1e-05
        %v1110 = vadd.f32 %v1012, 1e-05
        %v1111 = vadd.f32 %v1013, 1e-05
        %v1112 = vadd.f32 %v1014, 1e-05
        %v1113 = vadd.f32 %v1015, 1e-05
        %v1114 = vadd.f32 %v1016, 1e-05
        %v1115 = vadd.f32 %v1017, 1e-05
        %v1116 = vadd.f32 %v1018, 1e-05
        %v1117 = vadd.f32 %v1019, 1e-05
        %v1118 = vadd.f32 %v1020, 1e-05
        %v1119 = vadd.f32 %v1021, 1e-05
        %v1120 = vadd.f32 %v1022, 1e-05
        %v1121 = vadd.f32 %v1023, 1e-05
        %v1122 = vadd.f32 %v1024, 1e-05
        %v1123 = vadd.f32 %v1025, 1e-05
        %v1124 = vadd.f32 %v1026, 1e-05
        %v1125 = vadd.f32 %v1027, 1e-05
        %v1126 = vadd.f32 %v1028, 1e-05
        %v1127 = vadd.f32 %v1029, 1e-05
        %v1128 = vadd.f32 %v1030, 1e-05
        %v1129 = vadd.f32 %v1031, 1e-05
        %v1130 = vadd.f32 %v1032, 1e-05
        %v1131 = vadd.f32 %v1033, 1e-05
        %v1132 = vadd.f32 %v1034, 1e-05
        %v1133 = vadd.f32 %v1035, 1e-05
        %v1134 = vadd.f32 %v1036, 1e-05
        %v1135 = vadd.f32 %v1037, 1e-05
        %v1136 = vadd.f32 %v1038, 1e-05
        %v1137 = vadd.f32 %v1039, 1e-05
        %v1138 = vadd.f32 %v1040, 1e-05
        %v1139 = vadd.f32 %v1041, 1e-05
        %v1140 = vadd.f32 %v1042, 1e-05
        %v1141 = vadd.f32 %v1043, 1e-05
        %v1142 = vadd.f32 %v1044, 1e-05
        %v1143 = vadd.f32 %v1045, 1e-05
        %v1144 = vadd.f32 %v1046, 1e-05
        %v1145 = vadd.f32 %v1047, 1e-05
        %v1146 = vadd.f32 %v1048, 1e-05
        %v1147 = vadd.f32 %v1049, 1e-05
        %v1148 = vadd.f32 %v1050, 1e-05
        %v1149 = vadd.f32 %v1051, 1e-05
        %v1150 = vadd.f32 %v1052, 1e-05
        %v1151 = vadd.f32 %v1053, 1e-05
        %v1152 = vadd.f32 %v1054, 1e-05
        %v1153 = vadd.f32 %v1055, 1e-05
        %v1154 = vadd.f32 %v1056, 1e-05
        %v1155 = vadd.f32 %v1057, 1e-05
        %v1156 = vadd.f32 %v1058, 1e-05
        %v1157 = vadd.f32 %v1059, 1e-05
        %v1158 = vadd.f32 %v1060, 1e-05
        %v1159 = vadd.f32 %v1061, 1e-05
        %v1160 = vadd.f32 %v1062, 1e-05
        %v1161 = vadd.f32 %v1063, 1e-05
        %v1162 = vadd.f32 %v1064, 1e-05
        %v1163 = vadd.f32 %v1065, 1e-05
        %v1164 = vadd.f32 %v1066, 1e-05
        %v1165 = vadd.f32 %v1067, 1e-05
        %v1166 = vadd.f32 %v1068, 1e-05
        %v1167 = vadd.f32 %v1069, 1e-05
        %v1168 = vadd.f32 %v1070, 1e-05
        %v1169 = vadd.f32 %v1071, 1e-05
        %v1170 = vadd.f32 %v1072, 1e-05
        %v1171 = vadd.f32 %v1073, 1e-05
        %v1172 = vadd.f32 %v1074, 1e-05
        %v1173 = vadd.f32 %v1075, 1e-05
        %v1174 = vadd.f32 %v1076, 1e-05
        %v1175 = vadd.f32 %v1077, 1e-05
        %v1176 = vadd.f32 %v1078, 1e-05
        %v1177 = vadd.f32 %v1079, 1e-05
        %v1178 = vadd.f32 %v1080, 1e-05
        %v1179 = vadd.f32 %v1081, 1e-05
        %v1180 = vadd.f32 %v1082, 1e-05
        %v1181 = vadd.f32 %v1083, 1e-05
        %v1182 = vadd.f32 %v1084, 1e-05
        %v1183 = vadd.f32 %v1085, 1e-05
        %v1184 = vadd.f32 %v1086, 1e-05
        %v1185 = vadd.f32 %v1087, 1e-05
        %v1186 = vadd.f32 %v1088, 1e-05
        %v1187 = vadd.f32 %v1089, 1e-05
        %v1188 = vadd.f32 %v1090, 1e-05
        %v1189 = vadd.f32 %v1091, 1e-05
        %v1190 = vadd.f32 %v1092, 1e-05
        %v1191 = vadd.f32 %v1093, 1e-05
        %v1192 = vadd.f32 %v1094, 1e-05
        %v1193 = vadd.f32 %v1095, 1e-05
        %v1194 = vadd.f32 %v1096, 1e-05
        %v1195 = vadd.f32 %v1097, 1e-05
        %v1196 = vadd.f32 %v1098, 1e-05
        %v1197 = vadd.f32 %v1099, 1e-05
        %v1198 = vrsqrt.pop %v1100
        %v1199 = vrsqrt.pop %v1101
        %v1200 = vrsqrt.pop %v1102
        %v1201 = vrsqrt.pop %v1103
        %v1202 = vrsqrt.pop %v1104
        %v1203 = vrsqrt.pop %v1105
        %v1204 = vrsqrt.pop %v1106
        %v1205 = vrsqrt.pop %v1107
        %v1206 = vrsqrt.pop %v1108
        %v1207 = vrsqrt.pop %v1109
        %v1208 = vrsqrt.pop %v1110
        %v1209 = vrsqrt.pop %v1111
        %v1210 = vrsqrt.pop %v1112
        %v1211 = vrsqrt.pop %v1113
        %v1212 = vrsqrt.pop %v1114
        %v1213 = vrsqrt.pop %v1115
        %v1214 = vrsqrt.pop %v1116
        %v1215 = vrsqrt.pop %v1117
        %v1216 = vrsqrt.pop %v1118
        %v1217 = vrsqrt.pop %v1119
        %v1218 = vrsqrt.pop %v1120
        %v1219 = vrsqrt.pop %v1121
        %v1220 = vrsqrt.pop %v1122
        %v1221 = vrsqrt.pop %v1123
        %v1222 = vrsqrt.pop %v1124
        %v1223 = vrsqrt.pop %v1125
        %v1224 = vrsqrt.pop %v1126
        %v1225 = vrsqrt.pop %v1127
        %v1226 = vrsqrt.pop %v1128
        %v1227 = vrsqrt.pop %v1129
        %v1228 = vrsqrt.pop %v1130
        %v1229 = vrsqrt.pop %v1131
        %v1230 = vrsqrt.pop %v1132
        %v1231 = vrsqrt.pop %v1133
        %v1232 = vrsqrt.pop %v1134
        %v1233 = vrsqrt.pop %v1135
        %v1234 = vrsqrt.pop %v1136
        %v1235 = vrsqrt.pop %v1137
        %v1236 = vrsqrt.pop %v1138
        %v1237 = vrsqrt.pop %v1139
        %v1238 = vrsqrt.pop %v1140
        %v1239 = vrsqrt.pop %v1141
        %v1240 = vrsqrt.pop %v1142
        %v1241 = vrsqrt.pop %v1143
        %v1242 = vrsqrt.pop %v1144
        %v1243 = vrsqrt.pop %v1145
        %v1244 = vrsqrt.pop %v1146
        %v1245 = vrsqrt.pop %v1147
        %v1246 = vrsqrt.pop %v1148
        %v1247 = vrsqrt.pop %v1149
        %v1248 = vrsqrt.pop %v1150
        %v1249 = vrsqrt.pop %v1151
        %v1250 = vrsqrt.pop %v1152
        %v1251 = vrsqrt.pop %v1153
        %v1252 = vrsqrt.pop %v1154
        %v1253 = vrsqrt.pop %v1155
        %v1254 = vrsqrt.pop %v1156
        %v1255 = vrsqrt.pop %v1157
        %v1256 = vrsqrt.pop %v1158
        %v1257 = vrsqrt.pop %v1159
        %v1258 = vrsqrt.pop %v1160
        %v1259 = vrsqrt.pop %v1161
        %v1260 = vrsqrt.pop %v1162
        %v1261 = vrsqrt.pop %v1163
        %v1262 = vrsqrt.pop %v1164
        %v1263 = vrsqrt.pop %v1165
        %v1264 = vrsqrt.pop %v1166
        %v1265 = vrsqrt.pop %v1167
        %v1266 = vrsqrt.pop %v1168
        %v1267 = vrsqrt.pop %v1169
        %v1268 = vrsqrt.pop %v1170
        %v1269 = vrsqrt.pop %v1171
        %v1270 = vrsqrt.pop %v1172
        %v1271 = vrsqrt.pop %v1173
        %v1272 = vrsqrt.pop %v1174
        %v1273 = vrsqrt.pop %v1175
        %v1274 = vrsqrt.pop %v1176
        %v1275 = vrsqrt.pop %v1177
        %v1276 = vrsqrt.pop %v1178
        %v1277 = vrsqrt.pop %v1179
        %v1278 = vrsqrt.pop %v1180
        %v1279 = vrsqrt.pop %v1181
        %v1280 = vrsqrt.pop %v1182
        %v1281 = vrsqrt.pop %v1183
        %v1282 = vrsqrt.pop %v1184
        %v1283 = vrsqrt.pop %v1185
        %v1284 = vrsqrt.pop %v1186
        %v1285 = vrsqrt.pop %v1187
        %v1286 = vrsqrt.pop %v1188
        %v1287 = vrsqrt.pop %v1189
        %v1288 = vrsqrt.pop %v1190
        %v1289 = vrsqrt.pop %v1191
        %v1290 = vrsqrt.pop %v1192
        %v1291 = vrsqrt.pop %v1193
        %v1292 = vrsqrt.pop %v1194
        %v1293 = vrsqrt.pop %v1195
        %v1294 = vrsqrt.pop %v1196
        %v1295 = vrsqrt.pop %v1197
        %v1296 = vmul.f32 %v610, %v1198
        %v1297 = vmul.f32 %v611, %v1199
        %v1298 = vmul.f32 %v612, %v1200
        %v1299 = vmul.f32 %v613, %v1201
        %v1300 = vmul.f32 %v614, %v1202
        %v1301 = vmul.f32 %v615, %v1203
        %v1302 = vmul.f32 %v616, %v1204
        %v1303 = vmul.f32 %v617, %v1205
        %v1304 = vmul.f32 %v618, %v1206
        %v1305 = vmul.f32 %v619, %v1207
        %v1306 = vmul.f32 %v620, %v1208
        %v1307 = vmul.f32 %v621, %v1209
        %v1308 = vmul.f32 %v622, %v1210
        %v1309 = vmul.f32 %v623, %v1211
        %v1310 = vmul.f32 %v624, %v1212
        %v1311 = vmul.f32 %v625, %v1213
        %v1312 = vmul.f32 %v626, %v1214
        %v1313 = vmul.f32 %v627, %v1215
        %v1314 = vmul.f32 %v628, %v1216
        %v1315 = vmul.f32 %v629, %v1217
        %v1316 = vmul.f32 %v630, %v1218
        %v1317 = vmul.f32 %v631, %v1219
        %v1318 = vmul.f32 %v632, %v1220
        %v1319 = vmul.f32 %v633, %v1221
        %v1320 = vmul.f32 %v634, %v1222
        %v1321 = vmul.f32 %v635, %v1223
        %v1322 = vmul.f32 %v636, %v1224
        %v1323 = vmul.f32 %v637, %v1225
        %v1324 = vmul.f32 %v638, %v1226
        %v1325 = vmul.f32 %v639, %v1227
        %v1326 = vmul.f32 %v640, %v1228
        %v1327 = vmul.f32 %v641, %v1229
        %v1328 = vmul.f32 %v642, %v1230
        %v1329 = vmul.f32 %v643, %v1231
        %v1330 = vmul.f32 %v644, %v1232
        %v1331 = vmul.f32 %v645, %v1233
        %v1332 = vmul.f32 %v646, %v1234
        %v1333 = vmul.f32 %v647, %v1235
        %v1334 = vmul.f32 %v648, %v1236
        %v1335 = vmul.f32 %v649, %v1237
        %v1336 = vmul.f32 %v650, %v1238
        %v1337 = vmul.f32 %v651, %v1239
        %v1338 = vmul.f32 %v652, %v1240
        %v1339 = vmul.f32 %v653, %v1241
        %v1340 = vmul.f32 %v654, %v1242
        %v1341 = vmul.f32 %v655, %v1243
        %v1342 = vmul.f32 %v656, %v1244
        %v1343 = vmul.f32 %v657, %v1245
        %v1344 = vmul.f32 %v658, %v1246
        %v1345 = vmul.f32 %v659, %v1247
        %v1346 = vmul.f32 %v660, %v1248
        %v1347 = vmul.f32 %v661, %v1249
        %v1348 = vmul.f32 %v662, %v1250
        %v1349 = vmul.f32 %v663, %v1251
        %v1350 = vmul.f32 %v664, %v1252
        %v1351 = vmul.f32 %v665, %v1253
        %v1352 = vmul.f32 %v666, %v1254
        %v1353 = vmul.f32 %v667, %v1255
        %v1354 = vmul.f32 %v668, %v1256
        %v1355 = vmul.f32 %v669, %v1257
        %v1356 = vmul.f32 %v670, %v1258
        %v1357 = vmul.f32 %v671, %v1259
        %v1358 = vmul.f32 %v672, %v1260
        %v1359 = vmul.f32 %v673, %v1261
        %v1360 = vmul.f32 %v674, %v1262
        %v1361 = vmul.f32 %v675, %v1263
        %v1362 = vmul.f32 %v676, %v1264
        %v1363 = vmul.f32 %v677, %v1265
        %v1364 = vmul.f32 %v678, %v1266
        %v1365 = vmul.f32 %v679, %v1267
        %v1366 = vmul.f32 %v680, %v1268
        %v1367 = vmul.f32 %v681, %v1269
        %v1368 = vmul.f32 %v682, %v1270
        %v1369 = vmul.f32 %v683, %v1271
        %v1370 = vmul.f32 %v684, %v1272
        %v1371 = vmul.f32 %v685, %v1273
        %v1372 = vmul.f32 %v686, %v1274
        %v1373 = vmul.f32 %v687, %v1275
        %v1374 = vmul.f32 %v688, %v1276
        %v1375 = vmul.f32 %v689, %v1277
        %v1376 = vmul.f32 %v690, %v1278
        %v1377 = vmul.f32 %v691, %v1279
        %v1378 = vmul.f32 %v692, %v1280
        %v1379 = vmul.f32 %v693, %v1281
        %v1380 = vmul.f32 %v694, %v1282
        %v1381 = vmul.f32 %v695, %v1283
        %v1382 = vmul.f32 %v696, %v1284
        %v1383 = vmul.f32 %v697, %v1285
        %v1384 = vmul.f32 %v698, %v1286
        %v1385 = vmul.f32 %v699, %v1287
        %v1386 = vmul.f32 %v700, %v1288
        %v1387 = vmul.f32 %v701, %v1289
        %v1388 = vmul.f32 %v702, %v1290
        %v1389 = vmul.f32 %v703, %v1291
        %v1390 = vmul.f32 %v704, %v1292
        %v1391 = vmul.f32 %v705, %v1293
        %v1392 = vmul.f32 %v706, %v1294
        %v1393 = vmul.f32 %v707, %v1295
        %v1395 = vlaneseq
        %v1396 = vshrl.u32 %v1395, 7
        %v1397 = vsub.s32 0, %v1396
        %v1398 = vrot.slane %v314, %v1397
        %v1400 = vmul.f32 %v1296, %v1398
        %v1401 = vmul.f32 %v1297, %v1398
        %v1402 = vmul.f32 %v1298, %v1398
        %v1403 = vmul.f32 %v1299, %v1398
        %v1404 = vmul.f32 %v1300, %v1398
        %v1405 = vmul.f32 %v1301, %v1398
        %v1406 = vmul.f32 %v1302, %v1398
        %v1407 = vmul.f32 %v1303, %v1398
        %v1408 = vmul.f32 %v1304, %v1398
        %v1409 = vmul.f32 %v1305, %v1398
        %v1410 = vmul.f32 %v1306, %v1398
        %v1411 = vmul.f32 %v1307, %v1398
        %v1412 = vmul.f32 %v1308, %v1398
        %v1413 = vmul.f32 %v1309, %v1398
        %v1414 = vmul.f32 %v1310, %v1398
        %v1415 = vmul.f32 %v1311, %v1398
        %v1416 = vmul.f32 %v1312, %v1398
        %v1417 = vmul.f32 %v1313, %v1398
        %v1418 = vmul.f32 %v1314, %v1398
        %v1419 = vmul.f32 %v1315, %v1398
        %v1420 = vmul.f32 %v1316, %v1398
        %v1421 = vmul.f32 %v1317, %v1398
        %v1422 = vmul.f32 %v1318, %v1398
        %v1423 = vmul.f32 %v1319, %v1398
        %v1424 = vmul.f32 %v1320, %v1398
        %v1425 = vmul.f32 %v1321, %v1398
        %v1426 = vmul.f32 %v1322, %v1398
        %v1427 = vmul.f32 %v1323, %v1398
        %v1428 = vmul.f32 %v1324, %v1398
        %v1429 = vmul.f32 %v1325, %v1398
        %v1430 = vmul.f32 %v1326, %v1398
        %v1431 = vmul.f32 %v1327, %v1398
        %v1432 = vmul.f32 %v1328, %v1398
        %v1433 = vmul.f32 %v1329, %v1398
        %v1434 = vmul.f32 %v1330, %v1398
        %v1435 = vmul.f32 %v1331, %v1398
        %v1436 = vmul.f32 %v1332, %v1398
        %v1437 = vmul.f32 %v1333, %v1398
        %v1438 = vmul.f32 %v1334, %v1398
        %v1439 = vmul.f32 %v1335, %v1398
        %v1440 = vmul.f32 %v1336, %v1398
        %v1441 = vmul.f32 %v1337, %v1398
        %v1442 = vmul.f32 %v1338, %v1398
        %v1443 = vmul.f32 %v1339, %v1398
        %v1444 = vmul.f32 %v1340, %v1398
        %v1445 = vmul.f32 %v1341, %v1398
        %v1446 = vmul.f32 %v1342, %v1398
        %v1447 = vmul.f32 %v1343, %v1398
        %v1448 = vmul.f32 %v1344, %v1398
        %v1449 = vmul.f32 %v1345, %v1398
        %v1450 = vmul.f32 %v1346, %v1398
        %v1451 = vmul.f32 %v1347, %v1398
        %v1452 = vmul.f32 %v1348, %v1398
        %v1453 = vmul.f32 %v1349, %v1398
        %v1454 = vmul.f32 %v1350, %v1398
        %v1455 = vmul.f32 %v1351, %v1398
        %v1456 = vmul.f32 %v1352, %v1398
        %v1457 = vmul.f32 %v1353, %v1398
        %v1458 = vmul.f32 %v1354, %v1398
        %v1459 = vmul.f32 %v1355, %v1398
        %v1460 = vmul.f32 %v1356, %v1398
        %v1461 = vmul.f32 %v1357, %v1398
        %v1462 = vmul.f32 %v1358, %v1398
        %v1463 = vmul.f32 %v1359, %v1398
        %v1464 = vmul.f32 %v1360, %v1398
        %v1465 = vmul.f32 %v1361, %v1398
        %v1466 = vmul.f32 %v1362, %v1398
        %v1467 = vmul.f32 %v1363, %v1398
        %v1468 = vmul.f32 %v1364, %v1398
        %v1469 = vmul.f32 %v1365, %v1398
        %v1470 = vmul.f32 %v1366, %v1398
        %v1471 = vmul.f32 %v1367, %v1398
        %v1472 = vmul.f32 %v1368, %v1398
        %v1473 = vmul.f32 %v1369, %v1398
        %v1474 = vmul.f32 %v1370, %v1398
        %v1475 = vmul.f32 %v1371, %v1398
        %v1476 = vmul.f32 %v1372, %v1398
        %v1477 = vmul.f32 %v1373, %v1398
        %v1478 = vmul.f32 %v1374, %v1398
        %v1479 = vmul.f32 %v1375, %v1398
        %v1480 = vmul.f32 %v1376, %v1398
        %v1481 = vmul.f32 %v1377, %v1398
        %v1482 = vmul.f32 %v1378, %v1398
        %v1483 = vmul.f32 %v1379, %v1398
        %v1484 = vmul.f32 %v1380, %v1398
        %v1485 = vmul.f32 %v1381, %v1398
        %v1486 = vmul.f32 %v1382, %v1398
        %v1487 = vmul.f32 %v1383, %v1398
        %v1488 = vmul.f32 %v1384, %v1398
        %v1489 = vmul.f32 %v1385, %v1398
        %v1490 = vmul.f32 %v1386, %v1398
        %v1491 = vmul.f32 %v1387, %v1398
        %v1492 = vmul.f32 %v1388, %v1398
        %v1493 = vmul.f32 %v1389, %v1398
        %v1494 = vmul.f32 %v1390, %v1398
        %v1495 = vmul.f32 %v1391, %v1398
        %v1496 = vmul.f32 %v1392, %v1398
        %v1497 = vmul.f32 %v1393, %v1398
        %v1499 = vlaneseq
        %v1500 = vshrl.u32 %v1499, 7
        %v1501 = vsub.s32 0, %v1500
        %v1502 = vrot.slane %v315, %v1501
        %v1504 = vadd.f32 %v1400, %v1502
        %v1505 = vadd.f32 %v1401, %v1502
        %v1506 = vadd.f32 %v1402, %v1502
        %v1507 = vadd.f32 %v1403, %v1502
        %v1508 = vadd.f32 %v1404, %v1502
        %v1509 = vadd.f32 %v1405, %v1502
        %v1510 = vadd.f32 %v1406, %v1502
        %v1511 = vadd.f32 %v1407, %v1502
        %v1512 = vadd.f32 %v1408, %v1502
        %v1513 = vadd.f32 %v1409, %v1502
        %v1514 = vadd.f32 %v1410, %v1502
        %v1515 = vadd.f32 %v1411, %v1502
        %v1516 = vadd.f32 %v1412, %v1502
        %v1517 = vadd.f32 %v1413, %v1502
        %v1518 = vadd.f32 %v1414, %v1502
        %v1519 = vadd.f32 %v1415, %v1502
        %v1520 = vadd.f32 %v1416, %v1502
        %v1521 = vadd.f32 %v1417, %v1502
        %v1522 = vadd.f32 %v1418, %v1502
        %v1523 = vadd.f32 %v1419, %v1502
        %v1524 = vadd.f32 %v1420, %v1502
        %v1525 = vadd.f32 %v1421, %v1502
        %v1526 = vadd.f32 %v1422, %v1502
        %v1527 = vadd.f32 %v1423, %v1502
        %v1528 = vadd.f32 %v1424, %v1502
        %v1529 = vadd.f32 %v1425, %v1502
        %v1530 = vadd.f32 %v1426, %v1502
        %v1531 = vadd.f32 %v1427, %v1502
        %v1532 = vadd.f32 %v1428, %v1502
        %v1533 = vadd.f32 %v1429, %v1502
        %v1534 = vadd.f32 %v1430, %v1502
        %v1535 = vadd.f32 %v1431, %v1502
        %v1536 = vadd.f32 %v1432, %v1502
        %v1537 = vadd.f32 %v1433, %v1502
        %v1538 = vadd.f32 %v1434, %v1502
        %v1539 = vadd.f32 %v1435, %v1502
        %v1540 = vadd.f32 %v1436, %v1502
        %v1541 = vadd.f32 %v1437, %v1502
        %v1542 = vadd.f32 %v1438, %v1502
        %v1543 = vadd.f32 %v1439, %v1502
        %v1544 = vadd.f32 %v1440, %v1502
        %v1545 = vadd.f32 %v1441, %v1502
        %v1546 = vadd.f32 %v1442, %v1502
        %v1547 = vadd.f32 %v1443, %v1502
        %v1548 = vadd.f32 %v1444, %v1502
        %v1549 = vadd.f32 %v1445, %v1502
        %v1550 = vadd.f32 %v1446, %v1502
        %v1551 = vadd.f32 %v1447, %v1502
        %v1552 = vadd.f32 %v1448, %v1502
        %v1553 = vadd.f32 %v1449, %v1502
        %v1554 = vadd.f32 %v1450, %v1502
        %v1555 = vadd.f32 %v1451, %v1502
        %v1556 = vadd.f32 %v1452, %v1502
        %v1557 = vadd.f32 %v1453, %v1502
        %v1558 = vadd.f32 %v1454, %v1502
        %v1559 = vadd.f32 %v1455, %v1502
        %v1560 = vadd.f32 %v1456, %v1502
        %v1561 = vadd.f32 %v1457, %v1502
        %v1562 = vadd.f32 %v1458, %v1502
        %v1563 = vadd.f32 %v1459, %v1502
        %v1564 = vadd.f32 %v1460, %v1502
        %v1565 = vadd.f32 %v1461, %v1502
        %v1566 = vadd.f32 %v1462, %v1502
        %v1567 = vadd.f32 %v1463, %v1502
        %v1568 = vadd.f32 %v1464, %v1502
        %v1569 = vadd.f32 %v1465, %v1502
        %v1570 = vadd.f32 %v1466, %v1502
        %v1571 = vadd.f32 %v1467, %v1502
        %v1572 = vadd.f32 %v1468, %v1502
        %v1573 = vadd.f32 %v1469, %v1502
        %v1574 = vadd.f32 %v1470, %v1502
        %v1575 = vadd.f32 %v1471, %v1502
        %v1576 = vadd.f32 %v1472, %v1502
        %v1577 = vadd.f32 %v1473, %v1502
        %v1578 = vadd.f32 %v1474, %v1502
        %v1579 = vadd.f32 %v1475, %v1502
        %v1580 = vadd.f32 %v1476, %v1502
        %v1581 = vadd.f32 %v1477, %v1502
        %v1582 = vadd.f32 %v1478, %v1502
        %v1583 = vadd.f32 %v1479, %v1502
        %v1584 = vadd.f32 %v1480, %v1502
        %v1585 = vadd.f32 %v1481, %v1502
        %v1586 = vadd.f32 %v1482, %v1502
        %v1587 = vadd.f32 %v1483, %v1502
        %v1588 = vadd.f32 %v1484, %v1502
        %v1589 = vadd.f32 %v1485, %v1502
        %v1590 = vadd.f32 %v1486, %v1502
        %v1591 = vadd.f32 %v1487, %v1502
        %v1592 = vadd.f32 %v1488, %v1502
        %v1593 = vadd.f32 %v1489, %v1502
        %v1594 = vadd.f32 %v1490, %v1502
        %v1595 = vadd.f32 %v1491, %v1502
        %v1596 = vadd.f32 %v1492, %v1502
        %v1597 = vadd.f32 %v1493, %v1502
        %v1598 = vadd.f32 %v1494, %v1502
        %v1599 = vadd.f32 %v1495, %v1502
        %v1600 = vadd.f32 %v1496, %v1502
        %v1601 = vadd.f32 %v1497, %v1502
        %1602 = vst [vmem:[%s213] sm:$0xff] %v1504
        %1603 = vst [vmem:[%s213 + $0x8] sm:$0xff] %v1505
        %1604 = vst [vmem:[%s213 + $0x10] sm:$0xff] %v1506
        %1605 = vst [vmem:[%s213 + $0x18] sm:$0xff] %v1507
        %1606 = vst [vmem:[%s213 + $0x20] sm:$0xff] %v1508
        %1607 = vst [vmem:[%s213 + $0x28] sm:$0xff] %v1509
        %1608 = vst [vmem:[%s213 + $0x30] sm:$0xff] %v1510
        %1609 = vst [vmem:[%s213 + $0x38] sm:$0xff] %v1511
        %1610 = vst [vmem:[%s213 + $0x40] sm:$0xff] %v1512
        %1611 = vst [vmem:[%s213 + $0x48] sm:$0xff] %v1513
        %1612 = vst [vmem:[%s213 + $0x50] sm:$0xff] %v1514
        %1613 = vst [vmem:[%s213 + $0x58] sm:$0xff] %v1515
        %1614 = vst [vmem:[%s213 + $0x60] sm:$0xff] %v1516
        %1615 = vst [vmem:[%s213 + $0x68] sm:$0xff] %v1517
        %1616 = vst [vmem:[%s213 + $0x70] sm:$0xff] %v1518
        %1617 = vst [vmem:[%s213 + $0x78] sm:$0xff] %v1519
        %1618 = vst [vmem:[%s213 + $0x80] sm:$0xff] %v1520
        %1619 = vst [vmem:[%s213 + $0x88] sm:$0xff] %v1521
        %1620 = vst [vmem:[%s213 + $0x90] sm:$0xff] %v1522
        %1621 = vst [vmem:[%s213 + $0x98] sm:$0xff] %v1523
        %1622 = vst [vmem:[%s213 + $0xa0] sm:$0xff] %v1524
        %1623 = vst [vmem:[%s213 + $0xa8] sm:$0xff] %v1525
        %1624 = vst [vmem:[%s213 + $0xb0] sm:$0xff] %v1526
        %1625 = vst [vmem:[%s213 + $0xb8] sm:$0xff] %v1527
        %1626 = vst [vmem:[%s213 + $0xc0] sm:$0xff] %v1528
        %1627 = vst [vmem:[%s213 + $0xc8] sm:$0xff] %v1529
        %1628 = vst [vmem:[%s213 + $0xd0] sm:$0xff] %v1530
        %1629 = vst [vmem:[%s213 + $0xd8] sm:$0xff] %v1531
        %1630 = vst [vmem:[%s213 + $0xe0] sm:$0xff] %v1532
        %1631 = vst [vmem:[%s213 + $0xe8] sm:$0xff] %v1533
        %1632 = vst [vmem:[%s213 + $0xf0] sm:$0xff] %v1534
        %1633 = vst [vmem:[%s213 + $0xf8] sm:$0xff] %v1535
        %1634 = vst [vmem:[%s213 + $0x100] sm:$0xff] %v1536
        %1635 = vst [vmem:[%s213 + $0x108] sm:$0xff] %v1537
        %1636 = vst [vmem:[%s213 + $0x110] sm:$0xff] %v1538
        %1637 = vst [vmem:[%s213 + $0x118] sm:$0xff] %v1539
        %1638 = vst [vmem:[%s213 + $0x120] sm:$0xff] %v1540
        %1639 = vst [vmem:[%s213 + $0x128] sm:$0xff] %v1541
        %1640 = vst [vmem:[%s213 + $0x130] sm:$0xff] %v1542
        %1641 = vst [vmem:[%s213 + $0x138] sm:$0xff] %v1543
        %1642 = vst [vmem:[%s213 + $0x140] sm:$0xff] %v1544
        %1643 = vst [vmem:[%s213 + $0x148] sm:$0xff] %v1545
        %1644 = vst [vmem:[%s213 + $0x150] sm:$0xff] %v1546
        %1645 = vst [vmem:[%s213 + $0x158] sm:$0xff] %v1547
        %1646 = vst [vmem:[%s213 + $0x160] sm:$0xff] %v1548
        %1647 = vst [vmem:[%s213 + $0x168] sm:$0xff] %v1549
        %1648 = vst [vmem:[%s213 + $0x170] sm:$0xff] %v1550
        %1649 = vst [vmem:[%s213 + $0x178] sm:$0xff] %v1551
        %1650 = vst [vmem:[%s213 + $0x180] sm:$0xff] %v1552
        %1651 = vst [vmem:[%s213 + $0x188] sm:$0xff] %v1553
        %1652 = vst [vmem:[%s213 + $0x190] sm:$0xff] %v1554
        %1653 = vst [vmem:[%s213 + $0x198] sm:$0xff] %v1555
        %1654 = vst [vmem:[%s213 + $0x1a0] sm:$0xff] %v1556
        %1655 = vst [vmem:[%s213 + $0x1a8] sm:$0xff] %v1557
        %1656 = vst [vmem:[%s213 + $0x1b0] sm:$0xff] %v1558
        %1657 = vst [vmem:[%s213 + $0x1b8] sm:$0xff] %v1559
        %1658 = vst [vmem:[%s213 + $0x1c0] sm:$0xff] %v1560
        %1659 = vst [vmem:[%s213 + $0x1c8] sm:$0xff] %v1561
        %1660 = vst [vmem:[%s213 + $0x1d0] sm:$0xff] %v1562
        %1661 = vst [vmem:[%s213 + $0x1d8] sm:$0xff] %v1563
        %1662 = vst [vmem:[%s213 + $0x1e0] sm:$0xff] %v1564
        %1663 = vst [vmem:[%s213 + $0x1e8] sm:$0xff] %v1565
        %1664 = vst [vmem:[%s213 + $0x1f0] sm:$0xff] %v1566
        %1665 = vst [vmem:[%s213 + $0x1f8] sm:$0xff] %v1567
        %1666 = vst [vmem:[%s213 + $0x200] sm:$0xff] %v1568
        %1667 = vst [vmem:[%s213 + $0x208] sm:$0xff] %v1569
        %1668 = vst [vmem:[%s213 + $0x210] sm:$0xff] %v1570
        %1669 = vst [vmem:[%s213 + $0x218] sm:$0xff] %v1571
        %1670 = vst [vmem:[%s213 + $0x220] sm:$0xff] %v1572
        %1671 = vst [vmem:[%s213 + $0x228] sm:$0xff] %v1573
        %1672 = vst [vmem:[%s213 + $0x230] sm:$0xff] %v1574
        %1673 = vst [vmem:[%s213 + $0x238] sm:$0xff] %v1575
        %1674 = vst [vmem:[%s213 + $0x240] sm:$0xff] %v1576
        %1675 = vst [vmem:[%s213 + $0x248] sm:$0xff] %v1577
        %1676 = vst [vmem:[%s213 + $0x250] sm:$0xff] %v1578
        %1677 = vst [vmem:[%s213 + $0x258] sm:$0xff] %v1579
        %1678 = vst [vmem:[%s213 + $0x260] sm:$0xff] %v1580
        %1679 = vst [vmem:[%s213 + $0x268] sm:$0xff] %v1581
        %1680 = vst [vmem:[%s213 + $0x270] sm:$0xff] %v1582
        %1681 = vst [vmem:[%s213 + $0x278] sm:$0xff] %v1583
        %1682 = vst [vmem:[%s213 + $0x280] sm:$0xff] %v1584
        %1683 = vst [vmem:[%s213 + $0x288] sm:$0xff] %v1585
        %1684 = vst [vmem:[%s213 + $0x290] sm:$0xff] %v1586
        %1685 = vst [vmem:[%s213 + $0x298] sm:$0xff] %v1587
        %1686 = vst [vmem:[%s213 + $0x2a0] sm:$0xff] %v1588
        %1687 = vst [vmem:[%s213 + $0x2a8] sm:$0xff] %v1589
        %1688 = vst [vmem:[%s213 + $0x2b0] sm:$0xff] %v1590
        %1689 = vst [vmem:[%s213 + $0x2b8] sm:$0xff] %v1591
        %1690 = vst [vmem:[%s213 + $0x2c0] sm:$0xff] %v1592
        %1691 = vst [vmem:[%s213 + $0x2c8] sm:$0xff] %v1593
        %1692 = vst [vmem:[%s213 + $0x2d0] sm:$0xff] %v1594
        %1693 = vst [vmem:[%s213 + $0x2d8] sm:$0xff] %v1595
        %1694 = vst [vmem:[%s213 + $0x2e0] sm:$0xff] %v1596
        %1695 = vst [vmem:[%s213 + $0x2e8] sm:$0xff] %v1597
        %1696 = vst [vmem:[%s213 + $0x2f0] sm:$0xff] %v1598
        %1697 = vst [vmem:[%s213 + $0x2f8] sm:$0xff] %v1599
        %1698 = vst [vmem:[%s213 + $0x300] sm:$0xff] %v1600
        %1699 = vst [vmem:[%s213 + $0x308] sm:$0xff] %v1601
        %s1700 = sand.u32 %s97, 1
        %s1701 = scalar_lea.sflag [#allocation4], %s1700
        %s1702 = sand.u32 %s97, 1
        %s1703 = smul.addr %s1702, 784
        %s1704 = scalar_lea.vmem [#allocation8], %s1703
        // Predicated region
        $region45: #{layernorm_pallas.1} parent=31 // pred_check
          %p1705 = pneg %p107
        $region46: #{layernorm_pallas.1} parent=31 // pred_check_branch
          %1707 = sbr.rel (%p1705) target = $region48
        $region47: #{layernorm_pallas.1} parent=31 // pred_region
          %s1708 = smul.u32 98, %s21
          %s1710 = ssub.s32 12544, 12544
          %1711 = vsyncadd %s1701, %s1710
          %s1712 = smul.addr %s1708, 128
          %s1713 = scalar_lea.hbm %s3, %s1712
          %s1714 = sshll.u32 %s1704, 4
          %s1715 = int_to_ptr.vmem [resolvable:$true] %s1714
          %1720 = dma.vmem_to_hbm [thread:$0]  %s1715, 12544, %s1713, %s1701, 128, 128, 8
        $region48: #{layernorm_pallas.1} parent=31 // pred_fallthru
          _
      $region32: #{layernorm_pallas.1} parent=5 // pred_fallthru
        _
      %p1721 = scmp.le.s32.totalorder 2, %s16
      // Predicated region
      $region49: #{layernorm_pallas.1} parent=5 // pred_check
        %p1722 = pneg %p1721
      $region50: #{layernorm_pallas.1} parent=5 // pred_check_branch
        %1724 = sbr.rel (%p1722) target = $region52
      $region51: #{layernorm_pallas.1} parent=5 // pred_region
        %s1725 = ssub.s32 %s16, 2
        // Predicated region
        $region53: #{layernorm_pallas.1} parent=51 // pred_check
          %p1726 = pneg %p113
        $region54: #{layernorm_pallas.1} parent=51 // pred_check_branch
          %1728 = sbr.rel (%p1726) target = $region56
        $region55: #{layernorm_pallas.1} parent=51 // pred_region
          %s1729 = sand.u32 %s98, 1
          %s1730 = scalar_lea.sflag [#allocation4], %s1729
          %s1731 = sand.u32 %s98, 1
          %s1732 = smul.addr %s1731, 784
          %s1733 = scalar_lea.vmem [#allocation8], %s1732
          %1734 = dma.done %s1730, 12544
        $region56: #{layernorm_pallas.1} parent=51 // pred_fallthru
          _
      $region52: #{layernorm_pallas.1} parent=5 // pred_fallthru
        _
    $region6: #{layernorm_pallas.1} parent=1 // loop_footer
      %s20 = sadd.s32 1, %s16
    $region7: #{layernorm_pallas.1} parent=1 // loop_footer_branch
      %15 = sbr.rel target = $region3
    $region8: #{layernorm_pallas.1} parent=1 // loop_exit
      _
    %1735 = vsyncpa [#allocation3], 1
    %s1736 = scalar_lea.sflag [#allocation3], 1
    %1737 = vsyncpa %s1736, 1
    %1738 = vsyncpa [#allocation6], 1
    %1739 = vsyncpa [#allocation4], 1
    %s1740 = scalar_lea.sflag [#allocation4], 1
    %1741 = vsyncpa %s1740, 1

</llo_original>
